<compile_context>
chip_gen: v7x
topology: tpu7x:2x2x1
jax: 0.10.0
libtpu: 0.0.40
codegen_flags: <defaults>
</compile_context>

<pallas_src>
import jax
import jax.numpy as jnp
from jax import lax
from jax.experimental import pallas as pl
from jax.experimental.pallas import tpu as pltpu


def rcab_kernel(xcol_ref, xres_ref, w1c_ref, b1_ref, w2c_ref, b2_ref,
                wdu1_ref, bdu1_ref, wdu2t_ref, bdu2_ref, smat_ref, out_ref):
    # xcol_ref : (1, 9C, HW)  im2col of the zero-padded input (one image)
    # xres_ref : (1, C, HW)   original input (for the residual add)
    # w1c_ref  : (C, 9C)      conv1 weight, index (cout, (ky*3+kx)*C + cin)
    # b1_ref   : (C, 1)
    # w2c_ref  : (3, C, 3C)   conv2 weight per ky, index (cout, kx*C + cin)
    # b2_ref   : (C, 1)
    # wdu1_ref : (C, Cr), bdu1_ref: (1, Cr)   channel-attention squeeze
    # wdu2t_ref: (C, Cr), bdu2_ref: (C, 1)    channel-attention excite (pre-T)
    # smat_ref : (4, HW, HW)  0/1 shift matrices [left, right, up, down]
    # out_ref  : (1, C, HW)   lane-dense output block (HW = multiple of 128)
    dot = lambda a, b: jnp.dot(a, b, preferred_element_type=jnp.float32)

    # ---- conv1 (3x3 "same") + ReLU: a single K = 9C matmul on the MXU ----
    y1 = jnp.maximum(dot(w1c_ref[...], xcol_ref[0]) + b1_ref[...], 0.0)  # (C, HW)

    # ---- conv2 (3x3 "same"): fold the kx taps into the contraction dim ----
    # Zero-padded spatial shifts are matmuls with banded 0/1 matrices (the
    # matrices also encode the border zeroing), keeping all operands
    # lane-dense and aligned.
    sl, sr, su, sd = smat_ref[0], smat_ref[1], smat_ref[2], smat_ref[3]
    y1cat = jnp.concatenate([dot(y1, sl), y1, dot(y1, sr)], axis=0)      # (3C, HW)
    p0 = dot(w2c_ref[0], y1cat)                                          # ky = 0
    p1 = dot(w2c_ref[1], y1cat)                                          # ky = 1
    p2 = dot(w2c_ref[2], y1cat)                                          # ky = 2
    y2 = p1 + dot(p0, su) + dot(p2, sd) + b2_ref[...]                    # (C, HW)

    # ---- CALayer: global avg pool -> 1x1 -> ReLU -> 1x1 -> sigmoid gate ----
    # Cr = 2 is a degenerate MXU shape, so keep it on the VPU/XLU.
    avg = jnp.mean(y2, axis=1, keepdims=True)                            # (C, 1)
    z = jnp.maximum(jnp.sum(wdu1_ref[...] * avg, axis=0, keepdims=True)
                    + bdu1_ref[...], 0.0)                                # (1, Cr)
    gate = jax.nn.sigmoid(jnp.sum(wdu2t_ref[...] * z, axis=1, keepdims=True)
                          + bdu2_ref[...])                               # (C, 1)

    # ---- channel gate + residual add, stored lane-dense ----
    out_ref[...] = (y2 * gate + xres_ref[0])[None].astype(out_ref.dtype)


def rcab_forward(x_nchw, params):
    """x_nchw: (B, C, H, W) float32.  Returns (B, C, H, W)."""
    w1, b1, w2, b2, wdu1, bdu1, wdu2, bdu2 = params
    B, C, H, W = x_nchw.shape
    HW = H * W
    Cr = wdu1.shape[1]
    K = 3

    # ---- XLA-side layout plumbing (keeps the kernel lane-dense) ----
    xpad = jnp.pad(x_nchw, ((0, 0), (0, 0), (1, 1), (1, 1)))
    cols = [xpad[:, :, ky:ky + H, kx:kx + W]
            for ky in range(K) for kx in range(K)]
    xcol = jnp.concatenate(cols, axis=1).reshape(B, K * K * C, HW)   # (B, 9C, HW)
    xres = x_nchw.reshape(B, C, HW)

    w1c = jnp.transpose(w1, (3, 0, 1, 2)).reshape(C, K * K * C)      # (C, 9C)
    w2c = jnp.transpose(w2, (0, 3, 1, 2)).reshape(K, C, K * C)       # (3, C, 3C)
    b1c = b1.reshape(C, 1)
    b2c = b2.reshape(C, 1)
    bdu1c = bdu1.reshape(1, Cr)
    wdu2t = jnp.transpose(wdu2)                                      # (C, Cr)
    bdu2c = bdu2.reshape(C, 1)

    # 0/1 banded matrices implementing zero-padded shifts of the flattened
    # spatial axis (h*W + w):  left/right = +/-1 column, up/down = +/-1 row.
    s = jnp.arange(HW)
    row, col = s[:, None], s[None, :]
    sl = ((col == row + 1) & (col % W != 0)).astype(jnp.float32)
    sr = ((col == row - 1) & (row % W != 0)).astype(jnp.float32)
    su = (col == row + W).astype(jnp.float32)
    sd = (col == row - W).astype(jnp.float32)
    smats = jnp.stack([sl, sr, su, sd], axis=0)                      # (4, HW, HW)

    full2 = lambda a: pl.BlockSpec(a.shape, lambda b: (0, 0))
    full3 = lambda a: pl.BlockSpec(a.shape, lambda b: (0, 0, 0))

    out = pl.pallas_call(
        rcab_kernel,
        out_shape=jax.ShapeDtypeStruct((B, C, HW), jnp.float32),
        grid_spec=pltpu.PrefetchScalarGridSpec(
            num_scalar_prefetch=0,
            grid=(B,),
            in_specs=[
                pl.BlockSpec((1, K * K * C, HW), lambda b: (b, 0, 0)),  # xcol
                pl.BlockSpec((1, C, HW), lambda b: (b, 0, 0)),          # xres
                full2(w1c), full2(b1c),
                full3(w2c), full2(b2c),
                full2(wdu1), full2(bdu1c), full2(wdu2t), full2(bdu2c),
                full3(smats),
            ],
            out_specs=pl.BlockSpec((1, C, HW), lambda b: (b, 0, 0)),
        ),
        compiler_params=pltpu.CompilerParams(
            dimension_semantics=("parallel",)),
    )(xcol, xres, w1c, b1c, w2c, b2c, wdu1, bdu1c, wdu2t, bdu2c, smats)

    return out.reshape(B, C, H, W)


def rcab_reference(x_nchw, params):
    """Pure-JAX reference (mirrors the PyTorch forward)."""
    w1, b1, w2, b2, wdu1, bdu1, wdu2, bdu2 = params
    x = jnp.transpose(x_nchw, (0, 2, 3, 1))  # NHWC
    dn = ("NHWC", "HWIO", "NHWC")
    y = lax.conv_general_dilated(x, w1, (1, 1), "SAME", dimension_numbers=dn)
    y = jnp.maximum(y + b1.reshape(1, 1, 1, -1), 0.0)
    y = lax.conv_general_dilated(y, w2, (1, 1), "SAME", dimension_numbers=dn)
    y = y + b2.reshape(1, 1, 1, -1)
    avg = jnp.mean(y, axis=(1, 2), keepdims=True)                    # (B,1,1,C)
    z = jnp.maximum(jnp.einsum("bijc,cd->bijd", avg, wdu1)
                    + bdu1.reshape(1, 1, 1, -1), 0.0)
    gate = jax.nn.sigmoid(jnp.einsum("bijd,dc->bijc", z, wdu2)
                          + bdu2.reshape(1, 1, 1, -1))
    out = y * gate + x
    return jnp.transpose(out, (0, 3, 1, 2))


if __name__ == "__main__":
    # RCAB(conv=default_conv, n_feat=32, kernel_size=3, reduction=16)
    B, C, H, W = 2, 32, 16, 16
    reduction = 16
    Cr = C // reduction

    key = jax.random.PRNGKey(0)
    ks = jax.random.split(key, 9)
    x = jax.random.normal(ks[0], (B, C, H, W), jnp.float32)

    w1 = jax.random.normal(ks[1], (3, 3, C, C), jnp.float32) * 0.05
    b1 = jax.random.normal(ks[2], (1, C), jnp.float32) * 0.05
    w2 = jax.random.normal(ks[3], (3, 3, C, C), jnp.float32) * 0.05
    b2 = jax.random.normal(ks[4], (1, C), jnp.float32) * 0.05
    wdu1 = jax.random.normal(ks[5], (C, Cr), jnp.float32) * 0.1
    bdu1 = jax.random.normal(ks[6], (1, Cr), jnp.float32) * 0.1
    wdu2 = jax.random.normal(ks[7], (Cr, C), jnp.float32) * 0.1
    bdu2 = jax.random.normal(ks[8], (1, C), jnp.float32) * 0.1
    params = (w1, b1, w2, b2, wdu1, bdu1, wdu2, bdu2)

    out = jax.jit(rcab_forward)(x, params)
    jax.block_until_ready(out)

    ref = rcab_reference(x, params)
    assert out.shape == (B, C, H, W)
    assert jnp.max(jnp.abs(out - ref)) < 1e-3, "mismatch vs. JAX reference"

    print("KERNEL_OK")
</pallas_src>

<mosaic_0001>
module attributes {stable_mosaic.version = 11 : i64} {
  func.func @rcab_kernel(%arg0: i32, %arg1: memref<1x288x256xf32, #tpu.memory_space<vmem>>, %arg2: memref<1x32x256xf32, #tpu.memory_space<vmem>>, %arg3: memref<32x288xf32, #tpu.memory_space<vmem>>, %arg4: memref<32x1xf32, #tpu.memory_space<vmem>>, %arg5: memref<3x32x96xf32, #tpu.memory_space<vmem>>, %arg6: memref<32x1xf32, #tpu.memory_space<vmem>>, %arg7: memref<32x2xf32, #tpu.memory_space<vmem>>, %arg8: memref<1x2xf32, #tpu.memory_space<vmem>>, %arg9: memref<32x2xf32, #tpu.memory_space<vmem>>, %arg10: memref<32x1xf32, #tpu.memory_space<vmem>>, %arg11: memref<4x256x256xf32, #tpu.memory_space<vmem>>, %arg12: memref<1x32x256xf32, #tpu.memory_space<vmem>>) attributes {dimension_semantics = [#tpu.dimension_semantics<parallel>], iteration_bounds = array<i64: 2>, scalar_prefetch = 0 : i64, scratch_operands = 0 : i64, tpu.core_type = #tpu.core_type<tc>, window_params = [{transform_indices = @transform_0, window_bounds = array<i64: 1, 288, 256>}, {transform_indices = @transform_1, window_bounds = array<i64: 1, 32, 256>}, {pipeline_mode = #tpu.pipeline_mode<synchronous>, transform_indices = @transform_2, window_bounds = array<i64: 32, 288>}, {pipeline_mode = #tpu.pipeline_mode<synchronous>, transform_indices = @transform_3, window_bounds = array<i64: 32, 1>}, {pipeline_mode = #tpu.pipeline_mode<synchronous>, transform_indices = @transform_4, window_bounds = array<i64: 3, 32, 96>}, {pipeline_mode = #tpu.pipeline_mode<synchronous>, transform_indices = @transform_5, window_bounds = array<i64: 32, 1>}, {pipeline_mode = #tpu.pipeline_mode<synchronous>, transform_indices = @transform_6, window_bounds = array<i64: 32, 2>}, {pipeline_mode = #tpu.pipeline_mode<synchronous>, transform_indices = @transform_7, window_bounds = array<i64: 1, 2>}, {pipeline_mode = #tpu.pipeline_mode<synchronous>, transform_indices = @transform_8, window_bounds = array<i64: 32, 2>}, {pipeline_mode = #tpu.pipeline_mode<synchronous>, transform_indices = @transform_9, window_bounds = array<i64: 32, 1>}, {pipeline_mode = #tpu.pipeline_mode<synchronous>, transform_indices = @transform_10, window_bounds = array<i64: 4, 256, 256>}, {transform_indices = @transform_11, window_bounds = array<i64: 1, 32, 256>}]} {
    %c0 = arith.constant 0 : index
    %c0_0 = arith.constant 0 : index
    %0 = vector.load %arg3[%c0, %c0_0] : memref<32x288xf32, #tpu.memory_space<vmem>>, vector<32x288xf32>
    %c0_1 = arith.constant 0 : index
    %c0_2 = arith.constant 0 : index
    %c0_3 = arith.constant 0 : index
    %1 = vector.load %arg1[%c0_1, %c0_2, %c0_3] : memref<1x288x256xf32, #tpu.memory_space<vmem>>, vector<1x288x256xf32>
    %2 = vector.shape_cast %1 : vector<1x288x256xf32> to vector<288x256xf32>
    %cst = arith.constant dense<0.000000e+00> : vector<32x256xf32>
    %3 = tpu.matmul %0, %2, %cst {dimension_numbers = #tpu.dot_dimension_numbers<[1], [0], [0], [1], [0, 0, 1, 1], [], []>} : vector<32x288xf32>, vector<288x256xf32>, vector<32x256xf32> -> vector<32x256xf32>
    %c0_4 = arith.constant 0 : index
    %c0_5 = arith.constant 0 : index
    %4 = vector.load %arg4[%c0_4, %c0_5] : memref<32x1xf32, #tpu.memory_space<vmem>>, vector<32x1xf32>
    %5 = vector.broadcast %4 : vector<32x1xf32> to vector<32x256xf32>
    %6 = arith.addf %3, %5 : vector<32x256xf32>
    %cst_6 = arith.constant 0.000000e+00 : f32
    %7 = vector.broadcast %cst_6 : f32 to vector<32x256xf32>
    %8 = arith.maximumf %6, %7 : vector<32x256xf32>
    %c0_7 = arith.constant 0 : index
    %c0_8 = arith.constant 0 : index
    %c0_9 = arith.constant 0 : index
    %9 = vector.load %arg11[%c0_7, %c0_8, %c0_9] : memref<4x256x256xf32, #tpu.memory_space<vmem>>, vector<1x256x256xf32>
    %10 = vector.shape_cast %9 : vector<1x256x256xf32> to vector<256x256xf32>
    %c1 = arith.constant 1 : index
    %c0_10 = arith.constant 0 : index
    %c0_11 = arith.constant 0 : index
    %11 = vector.load %arg11[%c1, %c0_10, %c0_11] : memref<4x256x256xf32, #tpu.memory_space<vmem>>, vector<1x256x256xf32>
    %12 = vector.shape_cast %11 : vector<1x256x256xf32> to vector<256x256xf32>
    %c2 = arith.constant 2 : index
    %c0_12 = arith.constant 0 : index
    %c0_13 = arith.constant 0 : index
    %13 = vector.load %arg11[%c2, %c0_12, %c0_13] : memref<4x256x256xf32, #tpu.memory_space<vmem>>, vector<1x256x256xf32>
    %14 = vector.shape_cast %13 : vector<1x256x256xf32> to vector<256x256xf32>
    %c3 = arith.constant 3 : index
    %c0_14 = arith.constant 0 : index
    %c0_15 = arith.constant 0 : index
    %15 = vector.load %arg11[%c3, %c0_14, %c0_15] : memref<4x256x256xf32, #tpu.memory_space<vmem>>, vector<1x256x256xf32>
    %16 = vector.shape_cast %15 : vector<1x256x256xf32> to vector<256x256xf32>
    %cst_16 = arith.constant dense<0.000000e+00> : vector<32x256xf32>
    %17 = tpu.matmul %8, %10, %cst_16 {dimension_numbers = #tpu.dot_dimension_numbers<[1], [0], [0], [1], [0, 0, 1, 1], [], []>} : vector<32x256xf32>, vector<256x256xf32>, vector<32x256xf32> -> vector<32x256xf32>
    %cst_17 = arith.constant dense<0.000000e+00> : vector<32x256xf32>
    %18 = tpu.matmul %8, %12, %cst_17 {dimension_numbers = #tpu.dot_dimension_numbers<[1], [0], [0], [1], [0, 0, 1, 1], [], []>} : vector<32x256xf32>, vector<256x256xf32>, vector<32x256xf32> -> vector<32x256xf32>
    %19 = tpu.concatenate %17, %8, %18 in 0 : vector<32x256xf32>, vector<32x256xf32>, vector<32x256xf32> -> vector<96x256xf32>
    %c0_18 = arith.constant 0 : index
    %c0_19 = arith.constant 0 : index
    %c0_20 = arith.constant 0 : index
    %20 = vector.load %arg5[%c0_18, %c0_19, %c0_20] : memref<3x32x96xf32, #tpu.memory_space<vmem>>, vector<1x32x96xf32>
    %21 = vector.shape_cast %20 : vector<1x32x96xf32> to vector<32x96xf32>
    %cst_21 = arith.constant dense<0.000000e+00> : vector<32x256xf32>
    %22 = tpu.matmul %21, %19, %cst_21 {dimension_numbers = #tpu.dot_dimension_numbers<[1], [0], [0], [1], [0, 0, 1, 1], [], []>} : vector<32x96xf32>, vector<96x256xf32>, vector<32x256xf32> -> vector<32x256xf32>
    %c1_22 = arith.constant 1 : index
    %c0_23 = arith.constant 0 : index
    %c0_24 = arith.constant 0 : index
    %23 = vector.load %arg5[%c1_22, %c0_23, %c0_24] : memref<3x32x96xf32, #tpu.memory_space<vmem>>, vector<1x32x96xf32>
    %24 = vector.shape_cast %23 : vector<1x32x96xf32> to vector<32x96xf32>
    %cst_25 = arith.constant dense<0.000000e+00> : vector<32x256xf32>
    %25 = tpu.matmul %24, %19, %cst_25 {dimension_numbers = #tpu.dot_dimension_numbers<[1], [0], [0], [1], [0, 0, 1, 1], [], []>} : vector<32x96xf32>, vector<96x256xf32>, vector<32x256xf32> -> vector<32x256xf32>
    %c2_26 = arith.constant 2 : index
    %c0_27 = arith.constant 0 : index
    %c0_28 = arith.constant 0 : index
    %26 = vector.load %arg5[%c2_26, %c0_27, %c0_28] : memref<3x32x96xf32, #tpu.memory_space<vmem>>, vector<1x32x96xf32>
    %27 = vector.shape_cast %26 : vector<1x32x96xf32> to vector<32x96xf32>
    %cst_29 = arith.constant dense<0.000000e+00> : vector<32x256xf32>
    %28 = tpu.matmul %27, %19, %cst_29 {dimension_numbers = #tpu.dot_dimension_numbers<[1], [0], [0], [1], [0, 0, 1, 1], [], []>} : vector<32x96xf32>, vector<96x256xf32>, vector<32x256xf32> -> vector<32x256xf32>
    %cst_30 = arith.constant dense<0.000000e+00> : vector<32x256xf32>
    %29 = tpu.matmul %22, %14, %cst_30 {dimension_numbers = #tpu.dot_dimension_numbers<[1], [0], [0], [1], [0, 0, 1, 1], [], []>} : vector<32x256xf32>, vector<256x256xf32>, vector<32x256xf32> -> vector<32x256xf32>
    %30 = arith.addf %25, %29 : vector<32x256xf32>
    %cst_31 = arith.constant dense<0.000000e+00> : vector<32x256xf32>
    %31 = tpu.matmul %28, %16, %cst_31 {dimension_numbers = #tpu.dot_dimension_numbers<[1], [0], [0], [1], [0, 0, 1, 1], [], []>} : vector<32x256xf32>, vector<256x256xf32>, vector<32x256xf32> -> vector<32x256xf32>
    %32 = arith.addf %30, %31 : vector<32x256xf32>
    %c0_32 = arith.constant 0 : index
    %c0_33 = arith.constant 0 : index
    %33 = vector.load %arg6[%c0_32, %c0_33] : memref<32x1xf32, #tpu.memory_space<vmem>>, vector<32x1xf32>
    %34 = vector.broadcast %33 : vector<32x1xf32> to vector<32x256xf32>
    %35 = arith.addf %32, %34 : vector<32x256xf32>
    %cst_34 = arith.constant dense<0.000000e+00> : vector<32xf32>
    %36 = vector.multi_reduction <add>, %35, %cst_34 [1] : vector<32x256xf32> to vector<32xf32>
    %37 = vector.shape_cast %36 : vector<32xf32> to vector<32x1xf32>
    %cst_35 = arith.constant 2.560000e+02 : f32
    %38 = vector.broadcast %cst_35 : f32 to vector<32x1xf32>
    %39 = arith.divf %37, %38 : vector<32x1xf32>
    %c0_36 = arith.constant 0 : index
    %c0_37 = arith.constant 0 : index
    %40 = vector.load %arg7[%c0_36, %c0_37] : memref<32x2xf32, #tpu.memory_space<vmem>>, vector<32x2xf32>
    %41 = vector.broadcast %39 : vector<32x1xf32> to vector<32x2xf32>
    %42 = arith.mulf %40, %41 : vector<32x2xf32>
    %cst_38 = arith.constant dense<0.000000e+00> : vector<2xf32>
    %43 = vector.multi_reduction <add>, %42, %cst_38 [0] : vector<32x2xf32> to vector<2xf32>
    %44 = vector.shape_cast %43 : vector<2xf32> to vector<1x2xf32>
    %c0_39 = arith.constant 0 : index
    %c0_40 = arith.constant 0 : index
    %45 = vector.load %arg8[%c0_39, %c0_40] : memref<1x2xf32, #tpu.memory_space<vmem>>, vector<1x2xf32>
    %46 = arith.addf %44, %45 : vector<1x2xf32>
    %cst_41 = arith.constant 0.000000e+00 : f32
    %47 = vector.broadcast %cst_41 : f32 to vector<1x2xf32>
    %48 = arith.maximumf %46, %47 : vector<1x2xf32>
    %c0_42 = arith.constant 0 : index
    %c0_43 = arith.constant 0 : index
    %49 = vector.load %arg9[%c0_42, %c0_43] : memref<32x2xf32, #tpu.memory_space<vmem>>, vector<32x2xf32>
    %50 = vector.broadcast %48 : vector<1x2xf32> to vector<32x2xf32>
    %51 = arith.mulf %49, %50 : vector<32x2xf32>
    %cst_44 = arith.constant dense<0.000000e+00> : vector<32xf32>
    %52 = vector.multi_reduction <add>, %51, %cst_44 [1] : vector<32x2xf32> to vector<32xf32>
    %53 = vector.shape_cast %52 : vector<32xf32> to vector<32x1xf32>
    %c0_45 = arith.constant 0 : index
    %c0_46 = arith.constant 0 : index
    %54 = vector.load %arg10[%c0_45, %c0_46] : memref<32x1xf32, #tpu.memory_space<vmem>>, vector<32x1xf32>
    %55 = arith.addf %53, %54 : vector<32x1xf32>
    %56 = arith.negf %55 : vector<32x1xf32>
    %57 = math.exp %56 : vector<32x1xf32>
    %cst_47 = arith.constant 1.000000e+00 : f32
    %58 = vector.broadcast %cst_47 : f32 to vector<32x1xf32>
    %59 = arith.addf %58, %57 : vector<32x1xf32>
    %60 = arith.divf %58, %59 : vector<32x1xf32>
    %61 = vector.broadcast %60 : vector<32x1xf32> to vector<32x256xf32>
    %62 = arith.mulf %35, %61 : vector<32x256xf32>
    %c0_48 = arith.constant 0 : index
    %c0_49 = arith.constant 0 : index
    %c0_50 = arith.constant 0 : index
    %63 = vector.load %arg2[%c0_48, %c0_49, %c0_50] : memref<1x32x256xf32, #tpu.memory_space<vmem>>, vector<1x32x256xf32>
    %64 = vector.shape_cast %63 : vector<1x32x256xf32> to vector<32x256xf32>
    %65 = arith.addf %62, %64 : vector<32x256xf32>
    %66 = vector.shape_cast %65 : vector<32x256xf32> to vector<1x32x256xf32>
    %c0_51 = arith.constant 0 : index
    %c0_52 = arith.constant 0 : index
    %c0_53 = arith.constant 0 : index
    %67 = vector.load %arg12[%c0_51, %c0_52, %c0_53] : memref<1x32x256xf32, #tpu.memory_space<vmem>>, vector<1x32x256xf32>
    tpu.vector_store %arg12[%c0_51, %c0_52, %c0_53], %66 {strides = array<i32>} : memref<1x32x256xf32, #tpu.memory_space<vmem>>, vector<1x32x256xf32>,
    return
  }
  func.func @transform_0(%arg0: i32) -> (i32, i32, i32) {
    %c0_i32 = arith.constant 0 : i32
    %c0_i32_0 = arith.constant 0 : i32
    %c0_i32_1 = arith.constant 0 : i32
    return %arg0, %c0_i32, %c0_i32_0 : i32, i32, i32
  }
  func.func @transform_1(%arg0: i32) -> (i32, i32, i32) {
    %c0_i32 = arith.constant 0 : i32
    %c0_i32_0 = arith.constant 0 : i32
    %c0_i32_1 = arith.constant 0 : i32
    return %arg0, %c0_i32, %c0_i32_0 : i32, i32, i32
  }
  func.func @transform_2(%arg0: i32) -> (i32, i32) {
    %c0_i32 = arith.constant 0 : i32
    %c0_i32_0 = arith.constant 0 : i32
    %c0_i32_1 = arith.constant 0 : i32
    return %c0_i32, %c0_i32_0 : i32, i32
  }
  func.func @transform_3(%arg0: i32) -> (i32, i32) {
    %c0_i32 = arith.constant 0 : i32
    %c0_i32_0 = arith.constant 0 : i32
    %c0_i32_1 = arith.constant 0 : i32
    return %c0_i32, %c0_i32_0 : i32, i32
  }
  func.func @transform_4(%arg0: i32) -> (i32, i32, i32) {
    %c0_i32 = arith.constant 0 : i32
    %c0_i32_0 = arith.constant 0 : i32
    %c0_i32_1 = arith.constant 0 : i32
    %c0_i32_2 = arith.constant 0 : i32
    return %c0_i32, %c0_i32_0, %c0_i32_1 : i32, i32, i32
  }
  func.func @transform_5(%arg0: i32) -> (i32, i32) {
    %c0_i32 = arith.constant 0 : i32
    %c0_i32_0 = arith.constant 0 : i32
    %c0_i32_1 = arith.constant 0 : i32
    return %c0_i32, %c0_i32_0 : i32, i32
  }
  func.func @transform_6(%arg0: i32) -> (i32, i32) {
    %c0_i32 = arith.constant 0 : i32
    %c0_i32_0 = arith.constant 0 : i32
    %c0_i32_1 = arith.constant 0 : i32
    return %c0_i32, %c0_i32_0 : i32, i32
  }
  func.func @transform_7(%arg0: i32) -> (i32, i32) {
    %c0_i32 = arith.constant 0 : i32
    %c0_i32_0 = arith.constant 0 : i32
    %c0_i32_1 = arith.constant 0 : i32
    return %c0_i32, %c0_i32_0 : i32, i32
  }
  func.func @transform_8(%arg0: i32) -> (i32, i32) {
    %c0_i32 = arith.constant 0 : i32
    %c0_i32_0 = arith.constant 0 : i32
    %c0_i32_1 = arith.constant 0 : i32
    return %c0_i32, %c0_i32_0 : i32, i32
  }
  func.func @transform_9(%arg0: i32) -> (i32, i32) {
    %c0_i32 = arith.constant 0 : i32
    %c0_i32_0 = arith.constant 0 : i32
    %c0_i32_1 = arith.constant 0 : i32
    return %c0_i32, %c0_i32_0 : i32, i32
  }
  func.func @transform_10(%arg0: i32) -> (i32, i32, i32) {
    %c0_i32 = arith.constant 0 : i32
    %c0_i32_0 = arith.constant 0 : i32
    %c0_i32_1 = arith.constant 0 : i32
    %c0_i32_2 = arith.constant 0 : i32
    return %c0_i32, %c0_i32_0, %c0_i32_1 : i32, i32, i32
  }
  func.func @transform_11(%arg0: i32) -> (i32, i32, i32) {
    %c0_i32 = arith.constant 0 : i32
    %c0_i32_0 = arith.constant 0 : i32
    %c0_i32_1 = arith.constant 0 : i32
    return %arg0, %c0_i32, %c0_i32_0 : i32, i32, i32
  }
}

</mosaic_0001>

<llo_original>
// kernel: rcab_forward.1
$region0: #{rcab_forward.1}
  #allocation0 [shape = 'u32[]', space=smem, size = 0x4, offset = 0x4, fixed_abs, tag = 'smem constant byte address 0x4 - core index']
  #allocation1 [shape = 'u32[144,128]{1,0:T(1,128)}', space=vmem, size = 0x12000, scoped, tag = 'internal scratch']
  %s0 = inlined_call_operand.vmem [shape: f32[2,288,256], index: 0, kind: input, shape index: {}]
  %s1 = inlined_call_operand.vmem [shape: f32[2,32,256], index: 1, kind: input, shape index: {}]
  %s2 = inlined_call_operand.vmem [shape: f32[32,288], index: 2, kind: input, shape index: {}]
  %s3 = inlined_call_operand.vmem [shape: f32[32,1], index: 3, kind: input, shape index: {}]
  %s4 = inlined_call_operand.vmem [shape: f32[3,32,96], index: 4, kind: input, shape index: {}]
  %s5 = inlined_call_operand.vmem [shape: f32[32,1], index: 5, kind: input, shape index: {}]
  %s6 = inlined_call_operand.vmem [shape: f32[32,2], index: 6, kind: input, shape index: {}]
  %s7 = inlined_call_operand.vmem [shape: f32[1,2], index: 7, kind: input, shape index: {}]
  %s8 = inlined_call_operand.vmem [shape: f32[32,2], index: 8, kind: input, shape index: {}]
  %s9 = inlined_call_operand.vmem [shape: f32[32,1], index: 9, kind: input, shape index: {}]
  %s10 = inlined_call_operand.vmem [shape: f32[4,256,256], index: 10, kind: input, shape index: {}]
  %s11 = inlined_call_operand.vmem [shape: f32[2,32,256], index: 11, kind: output, shape index: {}]
  %s12 = sld [smem:[#allocation0]]
  $region77: #{rcab_forward.1} parent=0
    _
  %s14 = ssub.s32 1, %s12
  %s15 = scalar_select 0, %s14, %s12
  loop: start=0, step=1, limit=4
  $region2: #{rcab_forward.1} parent=0 // loop_pre_header
    _
  $region3: #{rcab_forward.1} parent=0 // loop_header
    %s17 = sphi 0, %s21
    %p18 = scmp.ge.s32.totalorder %s17, 4
    %s27 = sphi 0, %s29
    %s30 = sphi 0, %s27
    %s31 = sphi 0, %s30
    %s47 = sphi 0, %s31
    %s53 = sphi 0, %s55
    %s56 = sphi 0, %s53
    %s57 = sphi 0, %s56
    %s73 = sphi 0, %s57
    %s77 = sphi 0, %s77
    %s79 = sphi 0, %s77
    %s80 = sphi 0, %s79
    %s94 = sphi 0, %s80
    %s98 = sphi 0, %s98
    %s100 = sphi 0, %s98
    %s101 = sphi 0, %s100
    %s115 = sphi 0, %s101
    %s119 = sphi 0, %s119
    %s121 = sphi 0, %s119
    %s122 = sphi 0, %s121
    %s136 = sphi 0, %s122
    %s140 = sphi 0, %s140
    %s142 = sphi 0, %s140
    %s143 = sphi 0, %s142
    %s157 = sphi 0, %s143
    %s161 = sphi 0, %s161
    %s163 = sphi 0, %s161
    %s164 = sphi 0, %s163
    %s178 = sphi 0, %s164
    %s182 = sphi 0, %s182
    %s184 = sphi 0, %s182
    %s185 = sphi 0, %s184
    %s199 = sphi 0, %s185
    %s203 = sphi 0, %s203
    %s205 = sphi 0, %s203
    %s206 = sphi 0, %s205
    %s220 = sphi 0, %s206
    %s224 = sphi 0, %s224
    %s226 = sphi 0, %s224
    %s227 = sphi 0, %s226
    %s241 = sphi 0, %s227
    %s245 = sphi 0, %s245
    %s247 = sphi 0, %s245
    %s248 = sphi 0, %s247
    %s262 = sphi 0, %s248
    %s268 = sphi 0, %s270
    %s271 = sphi 0, %s268
    %s272 = sphi 0, %s271
    %s288 = sphi 0, %s272
  $region4: #{rcab_forward.1} parent=0 // loop_header_branch
    %20 = sbr.rel (%p18) target = $region8
  $region5: #{rcab_forward.1} parent=0 // loop_body
    %s22 = ssub.s32 %s17, 1
    %s23 = ssub.s32 %s17, 2
    %s24 = sadd.s32 %s17, 1
    %s25 = ssub.s32 %s17, %s24
    %p26 = scmp.eq.s32.totalorder %s25, 0
    %s28 = sadd.s32 %s27, 1
    %s29 = scalar_select %p26, %s27, %s28
    %p32 = pneg %p26
    %p33 = scmp.eq.s32.totalorder %s17, 1
    %p34 = por %p32, %p33
    %p35 = scmp.ne.s32.totalorder %s27, %s30
    %p36 = scmp.eq.s32.totalorder %s17, 0
    %p37 = por %p35, %p36
    %p38 = scmp.ne.s32.totalorder %s27, %s30
    %p39 = scmp.eq.s32.totalorder %s22, 1
    %p40 = por %p38, %p39
    %p41 = scmp.ne.s32.totalorder %s30, %s31
    %p42 = scmp.eq.s32.totalorder %s22, 0
    %p43 = por %p41, %p42
    %p44 = scmp.ne.s32.totalorder %s30, %s31
    %p45 = scmp.eq.s32.totalorder %s23, 1
    %p46 = por %p44, %p45
    %p48 = scmp.ne.s32.totalorder %s31, %s47
    %p49 = scmp.eq.s32.totalorder %s23, 0
    %p50 = por %p48, %p49
    %s51 = ssub.s32 %s17, %s24
    %p52 = scmp.eq.s32.totalorder %s51, 0
    %s54 = sadd.s32 %s53, 1
    %s55 = scalar_select %p52, %s53, %s54
    %p58 = pneg %p52
    %p59 = scmp.eq.s32.totalorder %s17, 1
    %p60 = por %p58, %p59
    %p61 = scmp.ne.s32.totalorder %s53, %s56
    %p62 = scmp.eq.s32.totalorder %s17, 0
    %p63 = por %p61, %p62
    %p64 = scmp.ne.s32.totalorder %s53, %s56
    %p65 = scmp.eq.s32.totalorder %s22, 1
    %p66 = por %p64, %p65
    %p67 = scmp.ne.s32.totalorder %s56, %s57
    %p68 = scmp.eq.s32.totalorder %s22, 0
    %p69 = por %p67, %p68
    %p70 = scmp.ne.s32.totalorder %s56, %s57
    %p71 = scmp.eq.s32.totalorder %s23, 1
    %p72 = por %p70, %p71
    %p74 = scmp.ne.s32.totalorder %s57, %s73
    %p75 = scmp.eq.s32.totalorder %s23, 0
    %p76 = por %p74, %p75
    %s78 = sadd.s32 %s77, 1
    %p81 = scmp.eq.s32.totalorder %s17, 1
    %p82 = scmp.ne.s32.totalorder %s77, %s79
    %p83 = scmp.eq.s32.totalorder %s17, 0
    %p84 = por %p82, %p83
    %p85 = scmp.ne.s32.totalorder %s77, %s79
    %p86 = scmp.eq.s32.totalorder %s22, 1
    %p87 = por %p85, %p86
    %p88 = scmp.ne.s32.totalorder %s79, %s80
    %p89 = scmp.eq.s32.totalorder %s22, 0
    %p90 = por %p88, %p89
    %p91 = scmp.ne.s32.totalorder %s79, %s80
    %p92 = scmp.eq.s32.totalorder %s23, 1
    %p93 = por %p91, %p92
    %p95 = scmp.ne.s32.totalorder %s80, %s94
    %p96 = scmp.eq.s32.totalorder %s23, 0
    %p97 = por %p95, %p96
    %s99 = sadd.s32 %s98, 1
    %p102 = scmp.eq.s32.totalorder %s17, 1
    %p103 = scmp.ne.s32.totalorder %s98, %s100
    %p104 = scmp.eq.s32.totalorder %s17, 0
    %p105 = por %p103, %p104
    %p106 = scmp.ne.s32.totalorder %s98, %s100
    %p107 = scmp.eq.s32.totalorder %s22, 1
    %p108 = por %p106, %p107
    %p109 = scmp.ne.s32.totalorder %s100, %s101
    %p110 = scmp.eq.s32.totalorder %s22, 0
    %p111 = por %p109, %p110
    %p112 = scmp.ne.s32.totalorder %s100, %s101
    %p113 = scmp.eq.s32.totalorder %s23, 1
    %p114 = por %p112, %p113
    %p116 = scmp.ne.s32.totalorder %s101, %s115
    %p117 = scmp.eq.s32.totalorder %s23, 0
    %p118 = por %p116, %p117
    %s120 = sadd.s32 %s119, 1
    %p123 = scmp.eq.s32.totalorder %s17, 1
    %p124 = scmp.ne.s32.totalorder %s119, %s121
    %p125 = scmp.eq.s32.totalorder %s17, 0
    %p126 = por %p124, %p125
    %p127 = scmp.ne.s32.totalorder %s119, %s121
    %p128 = scmp.eq.s32.totalorder %s22, 1
    %p129 = por %p127, %p128
    %p130 = scmp.ne.s32.totalorder %s121, %s122
    %p131 = scmp.eq.s32.totalorder %s22, 0
    %p132 = por %p130, %p131
    %p133 = scmp.ne.s32.totalorder %s121, %s122
    %p134 = scmp.eq.s32.totalorder %s23, 1
    %p135 = por %p133, %p134
    %p137 = scmp.ne.s32.totalorder %s122, %s136
    %p138 = scmp.eq.s32.totalorder %s23, 0
    %p139 = por %p137, %p138
    %s141 = sadd.s32 %s140, 1
    %p144 = scmp.eq.s32.totalorder %s17, 1
    %p145 = scmp.ne.s32.totalorder %s140, %s142
    %p146 = scmp.eq.s32.totalorder %s17, 0
    %p147 = por %p145, %p146
    %p148 = scmp.ne.s32.totalorder %s140, %s142
    %p149 = scmp.eq.s32.totalorder %s22, 1
    %p150 = por %p148, %p149
    %p151 = scmp.ne.s32.totalorder %s142, %s143
    %p152 = scmp.eq.s32.totalorder %s22, 0
    %p153 = por %p151, %p152
    %p154 = scmp.ne.s32.totalorder %s142, %s143
    %p155 = scmp.eq.s32.totalorder %s23, 1
    %p156 = por %p154, %p155
    %p158 = scmp.ne.s32.totalorder %s143, %s157
    %p159 = scmp.eq.s32.totalorder %s23, 0
    %p160 = por %p158, %p159
    %s162 = sadd.s32 %s161, 1
    %p165 = scmp.eq.s32.totalorder %s17, 1
    %p166 = scmp.ne.s32.totalorder %s161, %s163
    %p167 = scmp.eq.s32.totalorder %s17, 0
    %p168 = por %p166, %p167
    %p169 = scmp.ne.s32.totalorder %s161, %s163
    %p170 = scmp.eq.s32.totalorder %s22, 1
    %p171 = por %p169, %p170
    %p172 = scmp.ne.s32.totalorder %s163, %s164
    %p173 = scmp.eq.s32.totalorder %s22, 0
    %p174 = por %p172, %p173
    %p175 = scmp.ne.s32.totalorder %s163, %s164
    %p176 = scmp.eq.s32.totalorder %s23, 1
    %p177 = por %p175, %p176
    %p179 = scmp.ne.s32.totalorder %s164, %s178
    %p180 = scmp.eq.s32.totalorder %s23, 0
    %p181 = por %p179, %p180
    %s183 = sadd.s32 %s182, 1
    %p186 = scmp.eq.s32.totalorder %s17, 1
    %p187 = scmp.ne.s32.totalorder %s182, %s184
    %p188 = scmp.eq.s32.totalorder %s17, 0
    %p189 = por %p187, %p188
    %p190 = scmp.ne.s32.totalorder %s182, %s184
    %p191 = scmp.eq.s32.totalorder %s22, 1
    %p192 = por %p190, %p191
    %p193 = scmp.ne.s32.totalorder %s184, %s185
    %p194 = scmp.eq.s32.totalorder %s22, 0
    %p195 = por %p193, %p194
    %p196 = scmp.ne.s32.totalorder %s184, %s185
    %p197 = scmp.eq.s32.totalorder %s23, 1
    %p198 = por %p196, %p197
    %p200 = scmp.ne.s32.totalorder %s185, %s199
    %p201 = scmp.eq.s32.totalorder %s23, 0
    %p202 = por %p200, %p201
    %s204 = sadd.s32 %s203, 1
    %p207 = scmp.eq.s32.totalorder %s17, 1
    %p208 = scmp.ne.s32.totalorder %s203, %s205
    %p209 = scmp.eq.s32.totalorder %s17, 0
    %p210 = por %p208, %p209
    %p211 = scmp.ne.s32.totalorder %s203, %s205
    %p212 = scmp.eq.s32.totalorder %s22, 1
    %p213 = por %p211, %p212
    %p214 = scmp.ne.s32.totalorder %s205, %s206
    %p215 = scmp.eq.s32.totalorder %s22, 0
    %p216 = por %p214, %p215
    %p217 = scmp.ne.s32.totalorder %s205, %s206
    %p218 = scmp.eq.s32.totalorder %s23, 1
    %p219 = por %p217, %p218
    %p221 = scmp.ne.s32.totalorder %s206, %s220
    %p222 = scmp.eq.s32.totalorder %s23, 0
    %p223 = por %p221, %p222
    %s225 = sadd.s32 %s224, 1
    %p228 = scmp.eq.s32.totalorder %s17, 1
    %p229 = scmp.ne.s32.totalorder %s224, %s226
    %p230 = scmp.eq.s32.totalorder %s17, 0
    %p231 = por %p229, %p230
    %p232 = scmp.ne.s32.totalorder %s224, %s226
    %p233 = scmp.eq.s32.totalorder %s22, 1
    %p234 = por %p232, %p233
    %p235 = scmp.ne.s32.totalorder %s226, %s227
    %p236 = scmp.eq.s32.totalorder %s22, 0
    %p237 = por %p235, %p236
    %p238 = scmp.ne.s32.totalorder %s226, %s227
    %p239 = scmp.eq.s32.totalorder %s23, 1
    %p240 = por %p238, %p239
    %p242 = scmp.ne.s32.totalorder %s227, %s241
    %p243 = scmp.eq.s32.totalorder %s23, 0
    %p244 = por %p242, %p243
    %s246 = sadd.s32 %s245, 1
    %p249 = scmp.eq.s32.totalorder %s17, 1
    %p250 = scmp.ne.s32.totalorder %s245, %s247
    %p251 = scmp.eq.s32.totalorder %s17, 0
    %p252 = por %p250, %p251
    %p253 = scmp.ne.s32.totalorder %s245, %s247
    %p254 = scmp.eq.s32.totalorder %s22, 1
    %p255 = por %p253, %p254
    %p256 = scmp.ne.s32.totalorder %s247, %s248
    %p257 = scmp.eq.s32.totalorder %s22, 0
    %p258 = por %p256, %p257
    %p259 = scmp.ne.s32.totalorder %s247, %s248
    %p260 = scmp.eq.s32.totalorder %s23, 1
    %p261 = por %p259, %p260
    %p263 = scmp.ne.s32.totalorder %s248, %s262
    %p264 = scmp.eq.s32.totalorder %s23, 0
    %p265 = por %p263, %p264
    %s266 = ssub.s32 %s17, %s24
    %p267 = scmp.eq.s32.totalorder %s266, 0
    %s269 = sadd.s32 %s268, 1
    %s270 = scalar_select %p267, %s268, %s269
    %p273 = pneg %p267
    %p274 = scmp.eq.s32.totalorder %s17, 1
    %p275 = por %p273, %p274
    %p276 = scmp.ne.s32.totalorder %s268, %s271
    %p277 = scmp.eq.s32.totalorder %s17, 0
    %p278 = por %p276, %p277
    %p279 = scmp.ne.s32.totalorder %s268, %s271
    %p280 = scmp.eq.s32.totalorder %s22, 1
    %p281 = por %p279, %p280
    %p282 = scmp.ne.s32.totalorder %s271, %s272
    %p283 = scmp.eq.s32.totalorder %s22, 0
    %p284 = por %p282, %p283
    %p285 = scmp.ne.s32.totalorder %s271, %s272
    %p286 = scmp.eq.s32.totalorder %s23, 1
    %p287 = por %p285, %p286
    %p289 = scmp.ne.s32.totalorder %s272, %s288
    %p290 = scmp.eq.s32.totalorder %s23, 0
    %p291 = por %p289, %p290
    %p292 = scmp.le.s32.totalorder 1, %s17
    %p293 = scmp.lt.s32.totalorder %s17, 3
    %p294 = pnand %p292, %p293
    %p295 = pneg %p294
    // Predicated region
    $region9: #{rcab_forward.1} parent=5 // pred_check
      _
    $region10: #{rcab_forward.1} parent=5 // pred_check_branch
      %297 = sbr.rel (%p294) target = $region12
    $region11: #{rcab_forward.1} parent=5 // pred_region
      %s298 = ssub.s32 %s17, 1
      // Predicated region
      $region13: #{rcab_forward.1} parent=11 // pred_check
        %p299 = pneg %p90
      $region14: #{rcab_forward.1} parent=11 // pred_check_branch
        %301 = sbr.rel (%p299) target = $region16
      $region15: #{rcab_forward.1} parent=11 // pred_region
        _
      $region16: #{rcab_forward.1} parent=11 // pred_fallthru
        _
      // Predicated region
      $region17: #{rcab_forward.1} parent=11 // pred_check
        %p302 = pneg %p111
      $region18: #{rcab_forward.1} parent=11 // pred_check_branch
        %304 = sbr.rel (%p302) target = $region20
      $region19: #{rcab_forward.1} parent=11 // pred_region
        _
      $region20: #{rcab_forward.1} parent=11 // pred_fallthru
        _
      // Predicated region
      $region21: #{rcab_forward.1} parent=11 // pred_check
        %p305 = pneg %p132
      $region22: #{rcab_forward.1} parent=11 // pred_check_branch
        %307 = sbr.rel (%p305) target = $region24
      $region23: #{rcab_forward.1} parent=11 // pred_region
        _
      $region24: #{rcab_forward.1} parent=11 // pred_fallthru
        _
      // Predicated region
      $region25: #{rcab_forward.1} parent=11 // pred_check
        %p308 = pneg %p153
      $region26: #{rcab_forward.1} parent=11 // pred_check_branch
        %310 = sbr.rel (%p308) target = $region28
      $region27: #{rcab_forward.1} parent=11 // pred_region
        _
      $region28: #{rcab_forward.1} parent=11 // pred_fallthru
        _
      // Predicated region
      $region29: #{rcab_forward.1} parent=11 // pred_check
        %p311 = pneg %p174
      $region30: #{rcab_forward.1} parent=11 // pred_check_branch
        %313 = sbr.rel (%p311) target = $region32
      $region31: #{rcab_forward.1} parent=11 // pred_region
        _
      $region32: #{rcab_forward.1} parent=11 // pred_fallthru
        _
      // Predicated region
      $region33: #{rcab_forward.1} parent=11 // pred_check
        %p314 = pneg %p195
      $region34: #{rcab_forward.1} parent=11 // pred_check_branch
        %316 = sbr.rel (%p314) target = $region36
      $region35: #{rcab_forward.1} parent=11 // pred_region
        _
      $region36: #{rcab_forward.1} parent=11 // pred_fallthru
        _
      // Predicated region
      $region37: #{rcab_forward.1} parent=11 // pred_check
        %p317 = pneg %p216
      $region38: #{rcab_forward.1} parent=11 // pred_check_branch
        %319 = sbr.rel (%p317) target = $region40
      $region39: #{rcab_forward.1} parent=11 // pred_region
        _
      $region40: #{rcab_forward.1} parent=11 // pred_fallthru
        _
      // Predicated region
      $region41: #{rcab_forward.1} parent=11 // pred_check
        %p320 = pneg %p237
      $region42: #{rcab_forward.1} parent=11 // pred_check_branch
        %322 = sbr.rel (%p320) target = $region44
      $region43: #{rcab_forward.1} parent=11 // pred_region
        _
      $region44: #{rcab_forward.1} parent=11 // pred_fallthru
        _
      // Predicated region
      $region45: #{rcab_forward.1} parent=11 // pred_check
        %p323 = pneg %p258
      $region46: #{rcab_forward.1} parent=11 // pred_check_branch
        %325 = sbr.rel (%p323) target = $region48
      $region47: #{rcab_forward.1} parent=11 // pred_region
        _
      $region48: #{rcab_forward.1} parent=11 // pred_fallthru
        _
    $region12: #{rcab_forward.1} parent=5 // pred_fallthru
      _
    %p326 = scmp.lt.s32.totalorder %s17, 2
    // Predicated region
    $region49: #{rcab_forward.1} parent=5 // pred_check
      %p327 = pneg %p326
    $region50: #{rcab_forward.1} parent=5 // pred_check_branch
      %329 = sbr.rel (%p327) target = $region52
    $region51: #{rcab_forward.1} parent=5 // pred_region
      // Predicated region
      $region53: #{rcab_forward.1} parent=51 // pred_check
        %p330 = pneg %p37
      $region54: #{rcab_forward.1} parent=51 // pred_check_branch
        %332 = sbr.rel (%p330) target = $region56
      $region55: #{rcab_forward.1} parent=51 // pred_region
        %p333 = scmp.lt.s32.totalorder %s17, 1
        %s334 = scalar_select %p333, %s17, 1
        %s335 = smul.addr %s334, 72
        %s336 = smul.addr %s335, 8
        %s337 = scalar_lea.vmem %s0, %s336
      $region56: #{rcab_forward.1} parent=51 // pred_fallthru
        _
      // Predicated region
      $region57: #{rcab_forward.1} parent=51 // pred_check
        %p338 = pneg %p63
      $region58: #{rcab_forward.1} parent=51 // pred_check_branch
        %340 = sbr.rel (%p338) target = $region60
      $region59: #{rcab_forward.1} parent=51 // pred_region
        %p341 = scmp.lt.s32.totalorder %s17, 1
        %s342 = scalar_select %p341, %s17, 1
        %s343 = smul.addr %s342, 8
        %s344 = smul.addr %s343, 8
        %s345 = scalar_lea.vmem %s1, %s344
      $region60: #{rcab_forward.1} parent=51 // pred_fallthru
        _
    $region52: #{rcab_forward.1} parent=5 // pred_fallthru
      _
    %p346 = scmp.le.s32.totalorder 1, %s17
    %p347 = scmp.lt.s32.totalorder %s17, 3
    %p348 = pnand %p346, %p347
    %p349 = pneg %p348
    // Predicated region
    $region61: #{rcab_forward.1} parent=5 // pred_check
      _
    $region62: #{rcab_forward.1} parent=5 // pred_check_branch
      %351 = sbr.rel (%p348) target = $region64
    $region63: #{rcab_forward.1} parent=5 // pred_region
      %s352 = ssub.s32 %s17, 1
      %p353 = scmp.lt.s32.totalorder %s22, 1
      %s354 = scalar_select %p353, %s22, 1
      %s355 = smul.addr %s354, 72
      %s356 = smul.addr %s355, 8
      %s357 = scalar_lea.vmem %s0, %s356
      %p358 = pneg %p43
      %p359 = pneg %p40
      %p360 = scmp.lt.s32.totalorder %s22, 1
      %s361 = scalar_select %p360, %s22, 1
      %s362 = smul.addr %s361, 8
      %s363 = smul.addr %s362, 8
      %s364 = scalar_lea.vmem %s1, %s363
      %p365 = pneg %p69
      %p366 = pneg %p66
      %p367 = pneg %p90
      %p368 = pneg %p87
      %p369 = pneg %p111
      %p370 = pneg %p108
      %p371 = pneg %p132
      %p372 = pneg %p129
      %p373 = pneg %p153
      %p374 = pneg %p150
      %p375 = pneg %p174
      %p376 = pneg %p171
      %p377 = pneg %p195
      %p378 = pneg %p192
      %p379 = pneg %p216
      %p380 = pneg %p213
      %p381 = pneg %p237
      %p382 = pneg %p234
      %p383 = pneg %p258
      %p384 = pneg %p255
      %p385 = pneg %p284
      %p386 = pneg %p281
      %p387 = scmp.lt.s32.totalorder %s22, 1
      %s388 = scalar_select %p387, %s22, 1
      %s389 = smul.addr %s388, 8
      %s390 = smul.addr %s389, 8
      %s391 = scalar_lea.vmem %s11, %s390
      %p392 = scmp.lt.s32.totalorder %s22, 1
      %s393 = scalar_select %p392, %s22, 1
      %s394 = smul.addr %s393, 72
      %s395 = smul.addr %s394, 8
      %s396 = scalar_lea.vmem %s0, %s395
      %p397 = scmp.lt.s32.totalorder %s22, 1
      %s398 = scalar_select %p397, %s22, 1
      %s399 = smul.addr %s398, 8
      %s400 = smul.addr %s399, 8
      %s401 = scalar_lea.vmem %s1, %s400
      %p402 = scmp.lt.s32.totalorder %s22, 1
      %s403 = scalar_select %p402, %s22, 1
      %s404 = smul.addr %s403, 8
      %s405 = smul.addr %s404, 8
      %s406 = scalar_lea.vmem %s11, %s405
      %v407 = vld [vmem:[%s2] sm:$0xff]
      %v408 = vld [vmem:[%s2 + $0x8] sm:$0xff]
      %v409 = vld [vmem:[%s2 + $0x10] sm:$0xff]
      %v410 = vld [vmem:[%s2 + $0x18] sm:$0xff]
      %v411 = vld [vmem:[%s2 + $0x20] sm:$0xff]
      %v412 = vld [vmem:[%s2 + $0x28] sm:$0xff]
      %v413 = vld [vmem:[%s2 + $0x30] sm:$0xff]
      %v414 = vld [vmem:[%s2 + $0x38] sm:$0xff]
      %v415 = vld [vmem:[%s2 + $0x40] sm:$0xff]
      %v416 = vld [vmem:[%s2 + $0x48] sm:$0xff]
      %v417 = vld [vmem:[%s2 + $0x50] sm:$0xff]
      %v418 = vld [vmem:[%s2 + $0x58] sm:$0xff]
      %v419 = vld [vmem:[%s396] sm:$0xff]
      %v420 = vld [vmem:[%s396 + $0x8] sm:$0xff]
      %v421 = vld [vmem:[%s396 + $0x10] sm:$0xff]
      %v422 = vld [vmem:[%s396 + $0x18] sm:$0xff]
      %v423 = vld [vmem:[%s396 + $0x20] sm:$0xff]
      %v424 = vld [vmem:[%s396 + $0x28] sm:$0xff]
      %v425 = vld [vmem:[%s396 + $0x30] sm:$0xff]
      %v426 = vld [vmem:[%s396 + $0x38] sm:$0xff]
      %v427 = vld [vmem:[%s396 + $0x40] sm:$0xff]
      %v428 = vld [vmem:[%s396 + $0x48] sm:$0xff]
      %v429 = vld [vmem:[%s396 + $0x50] sm:$0xff]
      %v430 = vld [vmem:[%s396 + $0x58] sm:$0xff]
      %v431 = vld [vmem:[%s396 + $0x60] sm:$0xff]
      %v432 = vld [vmem:[%s396 + $0x68] sm:$0xff]
      %v433 = vld [vmem:[%s396 + $0x70] sm:$0xff]
      %v434 = vld [vmem:[%s396 + $0x78] sm:$0xff]
      %v435 = vld [vmem:[%s396 + $0x80] sm:$0xff]
      %v436 = vld [vmem:[%s396 + $0x88] sm:$0xff]
      %v437 = vld [vmem:[%s396 + $0x90] sm:$0xff]
      %v438 = vld [vmem:[%s396 + $0x98] sm:$0xff]
      %v439 = vld [vmem:[%s396 + $0xa0] sm:$0xff]
      %v440 = vld [vmem:[%s396 + $0xa8] sm:$0xff]
      %v441 = vld [vmem:[%s396 + $0xb0] sm:$0xff]
      %v442 = vld [vmem:[%s396 + $0xb8] sm:$0xff]
      %v443 = vld [vmem:[%s396 + $0xc0] sm:$0xff]
      %v444 = vld [vmem:[%s396 + $0xc8] sm:$0xff]
      %v445 = vld [vmem:[%s396 + $0xd0] sm:$0xff]
      %v446 = vld [vmem:[%s396 + $0xd8] sm:$0xff]
      %v447 = vld [vmem:[%s396 + $0xe0] sm:$0xff]
      %v448 = vld [vmem:[%s396 + $0xe8] sm:$0xff]
      %v449 = vld [vmem:[%s396 + $0xf0] sm:$0xff]
      %v450 = vld [vmem:[%s396 + $0xf8] sm:$0xff]
      %v451 = vld [vmem:[%s396 + $0x100] sm:$0xff]
      %v452 = vld [vmem:[%s396 + $0x108] sm:$0xff]
      %v453 = vld [vmem:[%s396 + $0x110] sm:$0xff]
      %v454 = vld [vmem:[%s396 + $0x118] sm:$0xff]
      %v455 = vld [vmem:[%s396 + $0x120] sm:$0xff]
      %v456 = vld [vmem:[%s396 + $0x128] sm:$0xff]
      %v457 = vld [vmem:[%s396 + $0x130] sm:$0xff]
      %v458 = vld [vmem:[%s396 + $0x138] sm:$0xff]
      %v459 = vld [vmem:[%s396 + $0x140] sm:$0xff]
      %v460 = vld [vmem:[%s396 + $0x148] sm:$0xff]
      %v461 = vld [vmem:[%s396 + $0x150] sm:$0xff]
      %v462 = vld [vmem:[%s396 + $0x158] sm:$0xff]
      %v463 = vld [vmem:[%s396 + $0x160] sm:$0xff]
      %v464 = vld [vmem:[%s396 + $0x168] sm:$0xff]
      %v465 = vld [vmem:[%s396 + $0x170] sm:$0xff]
      %v466 = vld [vmem:[%s396 + $0x178] sm:$0xff]
      %v467 = vld [vmem:[%s396 + $0x180] sm:$0xff]
      %v468 = vld [vmem:[%s396 + $0x188] sm:$0xff]
      %v469 = vld [vmem:[%s396 + $0x190] sm:$0xff]
      %v470 = vld [vmem:[%s396 + $0x198] sm:$0xff]
      %v471 = vld [vmem:[%s396 + $0x1a0] sm:$0xff]
      %v472 = vld [vmem:[%s396 + $0x1a8] sm:$0xff]
      %v473 = vld [vmem:[%s396 + $0x1b0] sm:$0xff]
      %v474 = vld [vmem:[%s396 + $0x1b8] sm:$0xff]
      %v475 = vld [vmem:[%s396 + $0x1c0] sm:$0xff]
      %v476 = vld [vmem:[%s396 + $0x1c8] sm:$0xff]
      %v477 = vld [vmem:[%s396 + $0x1d0] sm:$0xff]
      %v478 = vld [vmem:[%s396 + $0x1d8] sm:$0xff]
      %v479 = vld [vmem:[%s396 + $0x1e0] sm:$0xff]
      %v480 = vld [vmem:[%s396 + $0x1e8] sm:$0xff]
      %v481 = vld [vmem:[%s396 + $0x1f0] sm:$0xff]
      %v482 = vld [vmem:[%s396 + $0x1f8] sm:$0xff]
      %v483 = vld [vmem:[%s396 + $0x200] sm:$0xff]
      %v484 = vld [vmem:[%s396 + $0x208] sm:$0xff]
      %v485 = vld [vmem:[%s396 + $0x210] sm:$0xff]
      %v486 = vld [vmem:[%s396 + $0x218] sm:$0xff]
      %v487 = vld [vmem:[%s396 + $0x220] sm:$0xff]
      %v488 = vld [vmem:[%s396 + $0x228] sm:$0xff]
      %v489 = vld [vmem:[%s396 + $0x230] sm:$0xff]
      %v490 = vld [vmem:[%s396 + $0x238] sm:$0xff]
      %v491 = vld [vmem:[%s3] sm:$0xff]
      %v492 = vld [vmem:[%s3 + $0x8] sm:$0xff]
      %v493 = vld [vmem:[%s3 + $0x10] sm:$0xff]
      %v494 = vld [vmem:[%s3 + $0x18] sm:$0xff]
      %496 = vset.pattern.permute.xlu0 0
      %497 = vperm.xlu0 %496, %v491
      %v498 = vpop.permute.xlu0 %497
      %501 = vset.pattern.permute.xlu0 0
      %502 = vperm.xlu0 %501, %v492
      %v503 = vpop.permute.xlu0 %502
      %506 = vset.pattern.permute.xlu0 0
      %507 = vperm.xlu0 %506, %v493
      %v508 = vpop.permute.xlu0 %507
      %511 = vset.pattern.permute.xlu0 0
      %512 = vperm.xlu0 %511, %v494
      %v513 = vpop.permute.xlu0 %512
      %vm515 = vcmask 261120
      %v517 = vsel %vm515, %v409, 0
      %v520 = vsel %vm515, %v412, 0
      %v523 = vsel %vm515, %v415, 0
      %v526 = vsel %vm515, %v418, 0
      %528 = vmatprep.subr.mxu0 %v420
      %529 = vmatpush1.msra.mxu0 %v419
      %530 = vmatprep.subr.mxu0 %v422
      %531 = vmatpush1.msra.mxu0 %v421
      %532 = vmatprep.subr.mxu0 %v424
      %533 = vmatpush1.msra.mxu0 %v423
      %534 = vmatprep.subr.mxu0 %v426
      %535 = vmatpush1.msra.mxu0 %v425
      %536 = vmatprep.subr.mxu0 %v428
      %537 = vmatpush1.msra.mxu0 %v427
      %538 = vmatprep.subr.mxu0 %v430
      %539 = vmatpush1.msra.mxu0 %v429
      %540 = vmatprep.subr.mxu0 %v432
      %541 = vmatpush1.msra.mxu0 %v431
      %542 = vmatprep.subr.mxu0 %v434
      %543 = vmatpush1.msra.mxu0 %v433
      %544 = vmatprep.subr.mxu0 %v436
      %545 = vmatpush1.msra.mxu0 %v435
      %546 = vmatprep.subr.mxu0 %v438
      %547 = vmatpush1.msra.mxu0 %v437
      %548 = vmatprep.subr.mxu0 %v440
      %549 = vmatpush1.msra.mxu0 %v439
      %550 = vmatprep.subr.mxu0 %v442
      %551 = vmatpush1.msra.mxu0 %v441
      %552 = vmatprep.subr.mxu0 %v444
      %553 = vmatpush1.msra.mxu0 %v443
      %554 = vmatprep.subr.mxu0 %v446
      %555 = vmatpush1.msra.mxu0 %v445
      %556 = vmatprep.subr.mxu0 %v448
      %557 = vmatpush1.msra.mxu0 %v447
      %558 = vmatprep.subr.mxu0 %v450
      %559 = vmatpush1.msra.mxu0 %v449
      %560 = vmatprep.subr.mxu0 %v452
      %561 = vmatpush1.msra.mxu0 %v451
      %562 = vmatprep.subr.mxu0 %v454
      %563 = vmatpush1.msra.mxu0 %v453
      %564 = vmatprep.subr.mxu0 %v456
      %565 = vmatpush1.msra.mxu0 %v455
      %566 = vmatprep.subr.mxu0 %v458
      %567 = vmatpush1.msra.mxu0 %v457
      %568 = vmatprep.subr.mxu0 %v460
      %569 = vmatpush1.msra.mxu0 %v459
      %570 = vmatprep.subr.mxu0 %v462
      %571 = vmatpush1.msra.mxu0 %v461
      %572 = vmatprep.subr.mxu0 %v464
      %573 = vmatpush1.msra.mxu0 %v463
      %574 = vmatprep.subr.mxu0 %v466
      %575 = vmatpush1.msra.mxu0 %v465
      %576 = vmatprep.subr.mxu0 %v468
      %577 = vmatpush1.msra.mxu0 %v467
      %578 = vmatprep.subr.mxu0 %v470
      %579 = vmatpush1.msra.mxu0 %v469
      %580 = vmatprep.subr.mxu0 %v472
      %581 = vmatpush1.msra.mxu0 %v471
      %582 = vmatprep.subr.mxu0 %v474
      %583 = vmatpush1.msra.mxu0 %v473
      %584 = vmatprep.subr.mxu0 %v476
      %585 = vmatpush1.msra.mxu0 %v475
      %586 = vmatprep.subr.mxu0 %v478
      %587 = vmatpush1.msra.mxu0 %v477
      %588 = vmatprep.subr.mxu0 %v480
      %589 = vmatpush1.msra.mxu0 %v479
      %590 = vmatprep.subr.mxu0 %v482
      %591 = vmatpush1.msra.mxu0 %v481
      %592 = vmatprep.mubr.f32.mxu0 %v408
      %593 = vmatmul.mubr.f32.gmra.mrb[0].mxu0 %v407
      %v594 = vpop.f32.mrb[0].mxu0
      %v595 = vadd.f32 %v498, %v594
      %v596 = vpop.f32.mrb[0].mxu0
      %v597 = vadd.f32 %v498, %v596
      %598 = vmatprep.mubr.f32.mxu0 %v411
      %599 = vmatmul.mubr.f32.gmra.mrb[0].mxu0 %v410
      %v600 = vpop.f32.mrb[0].mxu0
      %v601 = vadd.f32 %v503, %v600
      %v602 = vpop.f32.mrb[0].mxu0
      %v603 = vadd.f32 %v503, %v602
      %604 = vmatprep.mubr.f32.mxu0 %v414
      %605 = vmatmul.mubr.f32.gmra.mrb[0].mxu0 %v413
      %v606 = vpop.f32.mrb[0].mxu0
      %v607 = vadd.f32 %v508, %v606
      %v608 = vpop.f32.mrb[0].mxu0
      %v609 = vadd.f32 %v508, %v608
      %610 = vmatprep.mubr.f32.mxu0 %v417
      %611 = vmatmul.mubr.f32.gmra.mrb[0].mxu0 %v416
      %v612 = vpop.f32.mrb[0].mxu0
      %v613 = vadd.f32 %v513, %v612
      %v614 = vpop.f32.mrb[0].mxu0
      %v615 = vadd.f32 %v513, %v614
      %616 = vdwg.mxu0
      %617 = vmatprep.subr.mxu0 %v484
      %618 = vmatpush1.msra.mxu0 %v483
      %619 = vmatprep.subr.mxu0 %v486
      %620 = vmatpush1.msra.mxu0 %v485
      %621 = vmatprep.subr.mxu0 %v488
      %622 = vmatpush1.msra.mxu0 %v487
      %623 = vmatprep.subr.mxu0 %v490
      %624 = vmatpush1.msra.mxu0 %v489
      %625 = vmatprep.subr.mxu0 0.0
      %626 = vmatpush1.msra.mxu0 0.0
      %627 = vmatprep.subr.mxu0 0.0
      %628 = vmatpush1.msra.mxu0 0.0
      %629 = vmatprep.subr.mxu0 0.0
      %630 = vmatpush1.msra.mxu0 0.0
      %631 = vmatprep.subr.mxu0 0.0
      %632 = vmatpush1.msra.mxu0 0.0
      %633 = vmatprep.subr.mxu0 0.0
      %634 = vmatpush1.msra.mxu0 0.0
      %635 = vmatprep.subr.mxu0 0.0
      %636 = vmatpush1.msra.mxu0 0.0
      %637 = vmatprep.subr.mxu0 0.0
      %638 = vmatpush1.msra.mxu0 0.0
      %639 = vmatprep.subr.mxu0 0.0
      %640 = vmatpush1.msra.mxu0 0.0
      %641 = vmatprep.subr.mxu0 0.0
      %642 = vmatpush1.msra.mxu0 0.0
      %643 = vmatprep.subr.mxu0 0.0
      %644 = vmatpush1.msra.mxu0 0.0
      %645 = vmatprep.subr.mxu0 0.0
      %646 = vmatpush1.msra.mxu0 0.0
      %647 = vmatprep.subr.mxu0 0.0
      %648 = vmatpush1.msra.mxu0 0.0
      %649 = vmatprep.subr.mxu0 0.0
      %650 = vmatpush1.msra.mxu0 0.0
      %651 = vmatprep.subr.mxu0 0.0
      %652 = vmatpush1.msra.mxu0 0.0
      %653 = vmatprep.subr.mxu0 0.0
      %654 = vmatpush1.msra.mxu0 0.0
      %655 = vmatprep.subr.mxu0 0.0
      %656 = vmatpush1.msra.mxu0 0.0
      %657 = vmatprep.subr.mxu0 0.0
      %658 = vmatpush1.msra.mxu0 0.0
      %659 = vmatprep.subr.mxu0 0.0
      %660 = vmatpush1.msra.mxu0 0.0
      %661 = vmatprep.subr.mxu0 0.0
      %662 = vmatpush1.msra.mxu0 0.0
      %663 = vmatprep.subr.mxu0 0.0
      %664 = vmatpush1.msra.mxu0 0.0
      %665 = vmatprep.subr.mxu0 0.0
      %666 = vmatpush1.msra.mxu0 0.0
      %667 = vmatprep.subr.mxu0 0.0
      %668 = vmatpush1.msra.mxu0 0.0
      %669 = vmatprep.subr.mxu0 0.0
      %670 = vmatpush1.msra.mxu0 0.0
      %671 = vmatprep.subr.mxu0 0.0
      %672 = vmatpush1.msra.mxu0 0.0
      %673 = vmatprep.subr.mxu0 0.0
      %674 = vmatpush1.msra.mxu0 0.0
      %675 = vmatprep.subr.mxu0 0.0
      %676 = vmatpush1.msra.mxu0 0.0
      %677 = vmatprep.subr.mxu0 0.0
      %678 = vmatpush1.msra.mxu0 0.0
      %679 = vmatprep.subr.mxu0 0.0
      %680 = vmatpush1.msra.mxu0 0.0
      %681 = vmatprep.mubr.f32.mxu0 0.0
      %682 = vmatmul.mubr.f32.gmra.mrb[0].mxu0 %v517
      %v683 = vpop.f32.mrb[0].mxu0
      %v684 = vadd.f32 %v595, %v683
      %v685 = vpop.f32.mrb[0].mxu0
      %v686 = vadd.f32 %v597, %v685
      %687 = vmatprep.mubr.f32.mxu0 0.0
      %688 = vmatmul.mubr.f32.gmra.mrb[0].mxu0 %v520
      %v689 = vpop.f32.mrb[0].mxu0
      %v690 = vadd.f32 %v601, %v689
      %v691 = vpop.f32.mrb[0].mxu0
      %v692 = vadd.f32 %v603, %v691
      %693 = vmatprep.mubr.f32.mxu0 0.0
      %694 = vmatmul.mubr.f32.gmra.mrb[0].mxu0 %v523
      %v695 = vpop.f32.mrb[0].mxu0
      %v696 = vadd.f32 %v607, %v695
      %v697 = vpop.f32.mrb[0].mxu0
      %v698 = vadd.f32 %v609, %v697
      %699 = vmatprep.mubr.f32.mxu0 0.0
      %700 = vmatmul.mubr.f32.gmra.mrb[0].mxu0 %v526
      %v701 = vpop.f32.mrb[0].mxu0
      %v702 = vadd.f32 %v613, %v701
      %v703 = vpop.f32.mrb[0].mxu0
      %v704 = vadd.f32 %v615, %v703
      %705 = vdwg.mxu0
      %v706 = vmax.f32 %v684, 0.0
      %v707 = vmax.f32 %v686, 0.0
      %v708 = vmax.f32 %v690, 0.0
      %v709 = vmax.f32 %v692, 0.0
      %v710 = vmax.f32 %v696, 0.0
      %v711 = vmax.f32 %v698, 0.0
      %v712 = vmax.f32 %v702, 0.0
      %v713 = vmax.f32 %v704, 0.0
      %v714 = vld [vmem:[%s10] sm:$0xff]
      %v715 = vld [vmem:[%s10 + $0x8] sm:$0xff]
      %v716 = vld [vmem:[%s10 + $0x10] sm:$0xff]
      %v717 = vld [vmem:[%s10 + $0x18] sm:$0xff]
      %v718 = vld [vmem:[%s10 + $0x20] sm:$0xff]
      %v719 = vld [vmem:[%s10 + $0x28] sm:$0xff]
      %v720 = vld [vmem:[%s10 + $0x30] sm:$0xff]
      %v721 = vld [vmem:[%s10 + $0x38] sm:$0xff]
      %v722 = vld [vmem:[%s10 + $0x40] sm:$0xff]
      %v723 = vld [vmem:[%s10 + $0x48] sm:$0xff]
      %v724 = vld [vmem:[%s10 + $0x50] sm:$0xff]
      %v725 = vld [vmem:[%s10 + $0x58] sm:$0xff]
      %v726 = vld [vmem:[%s10 + $0x60] sm:$0xff]
      %v727 = vld [vmem:[%s10 + $0x68] sm:$0xff]
      %v728 = vld [vmem:[%s10 + $0x70] sm:$0xff]
      %v729 = vld [vmem:[%s10 + $0x78] sm:$0xff]
      %v730 = vld [vmem:[%s10 + $0x80] sm:$0xff]
      %v731 = vld [vmem:[%s10 + $0x88] sm:$0xff]
      %v732 = vld [vmem:[%s10 + $0x90] sm:$0xff]
      %v733 = vld [vmem:[%s10 + $0x98] sm:$0xff]
      %v734 = vld [vmem:[%s10 + $0xa0] sm:$0xff]
      %v735 = vld [vmem:[%s10 + $0xa8] sm:$0xff]
      %v736 = vld [vmem:[%s10 + $0xb0] sm:$0xff]
      %v737 = vld [vmem:[%s10 + $0xb8] sm:$0xff]
      %v738 = vld [vmem:[%s10 + $0xc0] sm:$0xff]
      %v739 = vld [vmem:[%s10 + $0xc8] sm:$0xff]
      %v740 = vld [vmem:[%s10 + $0xd0] sm:$0xff]
      %v741 = vld [vmem:[%s10 + $0xd8] sm:$0xff]
      %v742 = vld [vmem:[%s10 + $0xe0] sm:$0xff]
      %v743 = vld [vmem:[%s10 + $0xe8] sm:$0xff]
      %v744 = vld [vmem:[%s10 + $0xf0] sm:$0xff]
      %v745 = vld [vmem:[%s10 + $0xf8] sm:$0xff]
      %v746 = vld [vmem:[%s10 + $0x100] sm:$0xff]
      %v747 = vld [vmem:[%s10 + $0x108] sm:$0xff]
      %v748 = vld [vmem:[%s10 + $0x110] sm:$0xff]
      %v749 = vld [vmem:[%s10 + $0x118] sm:$0xff]
      %v750 = vld [vmem:[%s10 + $0x120] sm:$0xff]
      %v751 = vld [vmem:[%s10 + $0x128] sm:$0xff]
      %v752 = vld [vmem:[%s10 + $0x130] sm:$0xff]
      %v753 = vld [vmem:[%s10 + $0x138] sm:$0xff]
      %v754 = vld [vmem:[%s10 + $0x140] sm:$0xff]
      %v755 = vld [vmem:[%s10 + $0x148] sm:$0xff]
      %v756 = vld [vmem:[%s10 + $0x150] sm:$0xff]
      %v757 = vld [vmem:[%s10 + $0x158] sm:$0xff]
      %v758 = vld [vmem:[%s10 + $0x160] sm:$0xff]
      %v759 = vld [vmem:[%s10 + $0x168] sm:$0xff]
      %v760 = vld [vmem:[%s10 + $0x170] sm:$0xff]
      %v761 = vld [vmem:[%s10 + $0x178] sm:$0xff]
      %v762 = vld [vmem:[%s10 + $0x180] sm:$0xff]
      %v763 = vld [vmem:[%s10 + $0x188] sm:$0xff]
      %v764 = vld [vmem:[%s10 + $0x190] sm:$0xff]
      %v765 = vld [vmem:[%s10 + $0x198] sm:$0xff]
      %v766 = vld [vmem:[%s10 + $0x1a0] sm:$0xff]
      %v767 = vld [vmem:[%s10 + $0x1a8] sm:$0xff]
      %v768 = vld [vmem:[%s10 + $0x1b0] sm:$0xff]
      %v769 = vld [vmem:[%s10 + $0x1b8] sm:$0xff]
      %v770 = vld [vmem:[%s10 + $0x1c0] sm:$0xff]
      %v771 = vld [vmem:[%s10 + $0x1c8] sm:$0xff]
      %v772 = vld [vmem:[%s10 + $0x1d0] sm:$0xff]
      %v773 = vld [vmem:[%s10 + $0x1d8] sm:$0xff]
      %v774 = vld [vmem:[%s10 + $0x1e0] sm:$0xff]
      %v775 = vld [vmem:[%s10 + $0x1e8] sm:$0xff]
      %v776 = vld [vmem:[%s10 + $0x1f0] sm:$0xff]
      %v777 = vld [vmem:[%s10 + $0x1f8] sm:$0xff]
      %s778 = scalar_lea.vmem %s10, 512
      %v779 = vld [vmem:[%s778] sm:$0xff]
      %v780 = vld [vmem:[%s778 + $0x8] sm:$0xff]
      %v781 = vld [vmem:[%s778 + $0x10] sm:$0xff]
      %v782 = vld [vmem:[%s778 + $0x18] sm:$0xff]
      %v783 = vld [vmem:[%s778 + $0x20] sm:$0xff]
      %v784 = vld [vmem:[%s778 + $0x28] sm:$0xff]
      %v785 = vld [vmem:[%s778 + $0x30] sm:$0xff]
      %v786 = vld [vmem:[%s778 + $0x38] sm:$0xff]
      %v787 = vld [vmem:[%s778 + $0x40] sm:$0xff]
      %v788 = vld [vmem:[%s778 + $0x48] sm:$0xff]
      %v789 = vld [vmem:[%s778 + $0x50] sm:$0xff]
      %v790 = vld [vmem:[%s778 + $0x58] sm:$0xff]
      %v791 = vld [vmem:[%s778 + $0x60] sm:$0xff]
      %v792 = vld [vmem:[%s778 + $0x68] sm:$0xff]
      %v793 = vld [vmem:[%s778 + $0x70] sm:$0xff]
      %v794 = vld [vmem:[%s778 + $0x78] sm:$0xff]
      %v795 = vld [vmem:[%s778 + $0x80] sm:$0xff]
      %v796 = vld [vmem:[%s778 + $0x88] sm:$0xff]
      %v797 = vld [vmem:[%s778 + $0x90] sm:$0xff]
      %v798 = vld [vmem:[%s778 + $0x98] sm:$0xff]
      %v799 = vld [vmem:[%s778 + $0xa0] sm:$0xff]
      %v800 = vld [vmem:[%s778 + $0xa8] sm:$0xff]
      %v801 = vld [vmem:[%s778 + $0xb0] sm:$0xff]
      %v802 = vld [vmem:[%s778 + $0xb8] sm:$0xff]
      %v803 = vld [vmem:[%s778 + $0xc0] sm:$0xff]
      %v804 = vld [vmem:[%s778 + $0xc8] sm:$0xff]
      %v805 = vld [vmem:[%s778 + $0xd0] sm:$0xff]
      %v806 = vld [vmem:[%s778 + $0xd8] sm:$0xff]
      %v807 = vld [vmem:[%s778 + $0xe0] sm:$0xff]
      %v808 = vld [vmem:[%s778 + $0xe8] sm:$0xff]
      %v809 = vld [vmem:[%s778 + $0xf0] sm:$0xff]
      %v810 = vld [vmem:[%s778 + $0xf8] sm:$0xff]
      %v811 = vld [vmem:[%s778 + $0x100] sm:$0xff]
      %v812 = vld [vmem:[%s778 + $0x108] sm:$0xff]
      %v813 = vld [vmem:[%s778 + $0x110] sm:$0xff]
      %v814 = vld [vmem:[%s778 + $0x118] sm:$0xff]
      %v815 = vld [vmem:[%s778 + $0x120] sm:$0xff]
      %v816 = vld [vmem:[%s778 + $0x128] sm:$0xff]
      %v817 = vld [vmem:[%s778 + $0x130] sm:$0xff]
      %v818 = vld [vmem:[%s778 + $0x138] sm:$0xff]
      %v819 = vld [vmem:[%s778 + $0x140] sm:$0xff]
      %v820 = vld [vmem:[%s778 + $0x148] sm:$0xff]
      %v821 = vld [vmem:[%s778 + $0x150] sm:$0xff]
      %v822 = vld [vmem:[%s778 + $0x158] sm:$0xff]
      %v823 = vld [vmem:[%s778 + $0x160] sm:$0xff]
      %v824 = vld [vmem:[%s778 + $0x168] sm:$0xff]
      %v825 = vld [vmem:[%s778 + $0x170] sm:$0xff]
      %v826 = vld [vmem:[%s778 + $0x178] sm:$0xff]
      %v827 = vld [vmem:[%s778 + $0x180] sm:$0xff]
      %v828 = vld [vmem:[%s778 + $0x188] sm:$0xff]
      %v829 = vld [vmem:[%s778 + $0x190] sm:$0xff]
      %v830 = vld [vmem:[%s778 + $0x198] sm:$0xff]
      %v831 = vld [vmem:[%s778 + $0x1a0] sm:$0xff]
      %v832 = vld [vmem:[%s778 + $0x1a8] sm:$0xff]
      %v833 = vld [vmem:[%s778 + $0x1b0] sm:$0xff]
      %v834 = vld [vmem:[%s778 + $0x1b8] sm:$0xff]
      %v835 = vld [vmem:[%s778 + $0x1c0] sm:$0xff]
      %v836 = vld [vmem:[%s778 + $0x1c8] sm:$0xff]
      %v837 = vld [vmem:[%s778 + $0x1d0] sm:$0xff]
      %v838 = vld [vmem:[%s778 + $0x1d8] sm:$0xff]
      %v839 = vld [vmem:[%s778 + $0x1e0] sm:$0xff]
      %v840 = vld [vmem:[%s778 + $0x1e8] sm:$0xff]
      %v841 = vld [vmem:[%s778 + $0x1f0] sm:$0xff]
      %v842 = vld [vmem:[%s778 + $0x1f8] sm:$0xff]
      %s843 = scalar_lea.vmem %s10, 1024
      %v844 = vld [vmem:[%s843] sm:$0xff]
      %v845 = vld [vmem:[%s843 + $0x8] sm:$0xff]
      %v846 = vld [vmem:[%s843 + $0x10] sm:$0xff]
      %v847 = vld [vmem:[%s843 + $0x18] sm:$0xff]
      %v848 = vld [vmem:[%s843 + $0x20] sm:$0xff]
      %v849 = vld [vmem:[%s843 + $0x28] sm:$0xff]
      %v850 = vld [vmem:[%s843 + $0x30] sm:$0xff]
      %v851 = vld [vmem:[%s843 + $0x38] sm:$0xff]
      %v852 = vld [vmem:[%s843 + $0x40] sm:$0xff]
      %v853 = vld [vmem:[%s843 + $0x48] sm:$0xff]
      %v854 = vld [vmem:[%s843 + $0x50] sm:$0xff]
      %v855 = vld [vmem:[%s843 + $0x58] sm:$0xff]
      %v856 = vld [vmem:[%s843 + $0x60] sm:$0xff]
      %v857 = vld [vmem:[%s843 + $0x68] sm:$0xff]
      %v858 = vld [vmem:[%s843 + $0x70] sm:$0xff]
      %v859 = vld [vmem:[%s843 + $0x78] sm:$0xff]
      %v860 = vld [vmem:[%s843 + $0x80] sm:$0xff]
      %v861 = vld [vmem:[%s843 + $0x88] sm:$0xff]
      %v862 = vld [vmem:[%s843 + $0x90] sm:$0xff]
      %v863 = vld [vmem:[%s843 + $0x98] sm:$0xff]
      %v864 = vld [vmem:[%s843 + $0xa0] sm:$0xff]
      %v865 = vld [vmem:[%s843 + $0xa8] sm:$0xff]
      %v866 = vld [vmem:[%s843 + $0xb0] sm:$0xff]
      %v867 = vld [vmem:[%s843 + $0xb8] sm:$0xff]
      %v868 = vld [vmem:[%s843 + $0xc0] sm:$0xff]
      %v869 = vld [vmem:[%s843 + $0xc8] sm:$0xff]
      %v870 = vld [vmem:[%s843 + $0xd0] sm:$0xff]
      %v871 = vld [vmem:[%s843 + $0xd8] sm:$0xff]
      %v872 = vld [vmem:[%s843 + $0xe0] sm:$0xff]
      %v873 = vld [vmem:[%s843 + $0xe8] sm:$0xff]
      %v874 = vld [vmem:[%s843 + $0xf0] sm:$0xff]
      %v875 = vld [vmem:[%s843 + $0xf8] sm:$0xff]
      %v876 = vld [vmem:[%s843 + $0x100] sm:$0xff]
      %v877 = vld [vmem:[%s843 + $0x108] sm:$0xff]
      %v878 = vld [vmem:[%s843 + $0x110] sm:$0xff]
      %v879 = vld [vmem:[%s843 + $0x118] sm:$0xff]
      %v880 = vld [vmem:[%s843 + $0x120] sm:$0xff]
      %v881 = vld [vmem:[%s843 + $0x128] sm:$0xff]
      %v882 = vld [vmem:[%s843 + $0x130] sm:$0xff]
      %v883 = vld [vmem:[%s843 + $0x138] sm:$0xff]
      %v884 = vld [vmem:[%s843 + $0x140] sm:$0xff]
      %v885 = vld [vmem:[%s843 + $0x148] sm:$0xff]
      %v886 = vld [vmem:[%s843 + $0x150] sm:$0xff]
      %v887 = vld [vmem:[%s843 + $0x158] sm:$0xff]
      %v888 = vld [vmem:[%s843 + $0x160] sm:$0xff]
      %v889 = vld [vmem:[%s843 + $0x168] sm:$0xff]
      %v890 = vld [vmem:[%s843 + $0x170] sm:$0xff]
      %v891 = vld [vmem:[%s843 + $0x178] sm:$0xff]
      %v892 = vld [vmem:[%s843 + $0x180] sm:$0xff]
      %v893 = vld [vmem:[%s843 + $0x188] sm:$0xff]
      %v894 = vld [vmem:[%s843 + $0x190] sm:$0xff]
      %v895 = vld [vmem:[%s843 + $0x198] sm:$0xff]
      %v896 = vld [vmem:[%s843 + $0x1a0] sm:$0xff]
      %v897 = vld [vmem:[%s843 + $0x1a8] sm:$0xff]
      %v898 = vld [vmem:[%s843 + $0x1b0] sm:$0xff]
      %v899 = vld [vmem:[%s843 + $0x1b8] sm:$0xff]
      %v900 = vld [vmem:[%s843 + $0x1c0] sm:$0xff]
      %v901 = vld [vmem:[%s843 + $0x1c8] sm:$0xff]
      %v902 = vld [vmem:[%s843 + $0x1d0] sm:$0xff]
      %v903 = vld [vmem:[%s843 + $0x1d8] sm:$0xff]
      %v904 = vld [vmem:[%s843 + $0x1e0] sm:$0xff]
      %v905 = vld [vmem:[%s843 + $0x1e8] sm:$0xff]
      %v906 = vld [vmem:[%s843 + $0x1f0] sm:$0xff]
      %v907 = vld [vmem:[%s843 + $0x1f8] sm:$0xff]
      %s908 = scalar_lea.vmem %s10, 1536
      %v909 = vld [vmem:[%s908] sm:$0xff]
      %v910 = vld [vmem:[%s908 + $0x8] sm:$0xff]
      %v911 = vld [vmem:[%s908 + $0x10] sm:$0xff]
      %v912 = vld [vmem:[%s908 + $0x18] sm:$0xff]
      %v913 = vld [vmem:[%s908 + $0x20] sm:$0xff]
      %v914 = vld [vmem:[%s908 + $0x28] sm:$0xff]
      %v915 = vld [vmem:[%s908 + $0x30] sm:$0xff]
      %v916 = vld [vmem:[%s908 + $0x38] sm:$0xff]
      %v917 = vld [vmem:[%s908 + $0x40] sm:$0xff]
      %v918 = vld [vmem:[%s908 + $0x48] sm:$0xff]
      %v919 = vld [vmem:[%s908 + $0x50] sm:$0xff]
      %v920 = vld [vmem:[%s908 + $0x58] sm:$0xff]
      %v921 = vld [vmem:[%s908 + $0x60] sm:$0xff]
      %v922 = vld [vmem:[%s908 + $0x68] sm:$0xff]
      %v923 = vld [vmem:[%s908 + $0x70] sm:$0xff]
      %v924 = vld [vmem:[%s908 + $0x78] sm:$0xff]
      %v925 = vld [vmem:[%s908 + $0x80] sm:$0xff]
      %v926 = vld [vmem:[%s908 + $0x88] sm:$0xff]
      %v927 = vld [vmem:[%s908 + $0x90] sm:$0xff]
      %v928 = vld [vmem:[%s908 + $0x98] sm:$0xff]
      %v929 = vld [vmem:[%s908 + $0xa0] sm:$0xff]
      %v930 = vld [vmem:[%s908 + $0xa8] sm:$0xff]
      %v931 = vld [vmem:[%s908 + $0xb0] sm:$0xff]
      %v932 = vld [vmem:[%s908 + $0xb8] sm:$0xff]
      %v933 = vld [vmem:[%s908 + $0xc0] sm:$0xff]
      %v934 = vld [vmem:[%s908 + $0xc8] sm:$0xff]
      %v935 = vld [vmem:[%s908 + $0xd0] sm:$0xff]
      %v936 = vld [vmem:[%s908 + $0xd8] sm:$0xff]
      %v937 = vld [vmem:[%s908 + $0xe0] sm:$0xff]
      %v938 = vld [vmem:[%s908 + $0xe8] sm:$0xff]
      %v939 = vld [vmem:[%s908 + $0xf0] sm:$0xff]
      %v940 = vld [vmem:[%s908 + $0xf8] sm:$0xff]
      %v941 = vld [vmem:[%s908 + $0x100] sm:$0xff]
      %v942 = vld [vmem:[%s908 + $0x108] sm:$0xff]
      %v943 = vld [vmem:[%s908 + $0x110] sm:$0xff]
      %v944 = vld [vmem:[%s908 + $0x118] sm:$0xff]
      %v945 = vld [vmem:[%s908 + $0x120] sm:$0xff]
      %v946 = vld [vmem:[%s908 + $0x128] sm:$0xff]
      %v947 = vld [vmem:[%s908 + $0x130] sm:$0xff]
      %v948 = vld [vmem:[%s908 + $0x138] sm:$0xff]
      %v949 = vld [vmem:[%s908 + $0x140] sm:$0xff]
      %v950 = vld [vmem:[%s908 + $0x148] sm:$0xff]
      %v951 = vld [vmem:[%s908 + $0x150] sm:$0xff]
      %v952 = vld [vmem:[%s908 + $0x158] sm:$0xff]
      %v953 = vld [vmem:[%s908 + $0x160] sm:$0xff]
      %v954 = vld [vmem:[%s908 + $0x168] sm:$0xff]
      %v955 = vld [vmem:[%s908 + $0x170] sm:$0xff]
      %v956 = vld [vmem:[%s908 + $0x178] sm:$0xff]
      %v957 = vld [vmem:[%s908 + $0x180] sm:$0xff]
      %v958 = vld [vmem:[%s908 + $0x188] sm:$0xff]
      %v959 = vld [vmem:[%s908 + $0x190] sm:$0xff]
      %v960 = vld [vmem:[%s908 + $0x198] sm:$0xff]
      %v961 = vld [vmem:[%s908 + $0x1a0] sm:$0xff]
      %v962 = vld [vmem:[%s908 + $0x1a8] sm:$0xff]
      %v963 = vld [vmem:[%s908 + $0x1b0] sm:$0xff]
      %v964 = vld [vmem:[%s908 + $0x1b8] sm:$0xff]
      %v965 = vld [vmem:[%s908 + $0x1c0] sm:$0xff]
      %v966 = vld [vmem:[%s908 + $0x1c8] sm:$0xff]
      %v967 = vld [vmem:[%s908 + $0x1d0] sm:$0xff]
      %v968 = vld [vmem:[%s908 + $0x1d8] sm:$0xff]
      %v969 = vld [vmem:[%s908 + $0x1e0] sm:$0xff]
      %v970 = vld [vmem:[%s908 + $0x1e8] sm:$0xff]
      %v971 = vld [vmem:[%s908 + $0x1f0] sm:$0xff]
      %v972 = vld [vmem:[%s908 + $0x1f8] sm:$0xff]
      %973 = vmatprep.subr.mxu0 %v715
      %974 = vmatpush1.msra.mxu0 %v714
      %975 = vmatprep.subr.mxu0 %v717
      %976 = vmatpush1.msra.mxu0 %v716
      %977 = vmatprep.subr.mxu0 %v719
      %978 = vmatpush1.msra.mxu0 %v718
      %979 = vmatprep.subr.mxu0 %v721
      %980 = vmatpush1.msra.mxu0 %v720
      %981 = vmatprep.subr.mxu0 %v723
      %982 = vmatpush1.msra.mxu0 %v722
      %983 = vmatprep.subr.mxu0 %v725
      %984 = vmatpush1.msra.mxu0 %v724
      %985 = vmatprep.subr.mxu0 %v727
      %986 = vmatpush1.msra.mxu0 %v726
      %987 = vmatprep.subr.mxu0 %v729
      %988 = vmatpush1.msra.mxu0 %v728
      %989 = vmatprep.subr.mxu0 %v731
      %990 = vmatpush1.msra.mxu0 %v730
      %991 = vmatprep.subr.mxu0 %v733
      %992 = vmatpush1.msra.mxu0 %v732
      %993 = vmatprep.subr.mxu0 %v735
      %994 = vmatpush1.msra.mxu0 %v734
      %995 = vmatprep.subr.mxu0 %v737
      %996 = vmatpush1.msra.mxu0 %v736
      %997 = vmatprep.subr.mxu0 %v739
      %998 = vmatpush1.msra.mxu0 %v738
      %999 = vmatprep.subr.mxu0 %v741
      %1000 = vmatpush1.msra.mxu0 %v740
      %1001 = vmatprep.subr.mxu0 %v743
      %1002 = vmatpush1.msra.mxu0 %v742
      %1003 = vmatprep.subr.mxu0 %v745
      %1004 = vmatpush1.msra.mxu0 %v744
      %1005 = vmatprep.subr.mxu0 %v747
      %1006 = vmatpush1.msra.mxu0 %v746
      %1007 = vmatprep.subr.mxu0 %v749
      %1008 = vmatpush1.msra.mxu0 %v748
      %1009 = vmatprep.subr.mxu0 %v751
      %1010 = vmatpush1.msra.mxu0 %v750
      %1011 = vmatprep.subr.mxu0 %v753
      %1012 = vmatpush1.msra.mxu0 %v752
      %1013 = vmatprep.subr.mxu0 %v755
      %1014 = vmatpush1.msra.mxu0 %v754
      %1015 = vmatprep.subr.mxu0 %v757
      %1016 = vmatpush1.msra.mxu0 %v756
      %1017 = vmatprep.subr.mxu0 %v759
      %1018 = vmatpush1.msra.mxu0 %v758
      %1019 = vmatprep.subr.mxu0 %v761
      %1020 = vmatpush1.msra.mxu0 %v760
      %1021 = vmatprep.subr.mxu0 %v763
      %1022 = vmatpush1.msra.mxu0 %v762
      %1023 = vmatprep.subr.mxu0 %v765
      %1024 = vmatpush1.msra.mxu0 %v764
      %1025 = vmatprep.subr.mxu0 %v767
      %1026 = vmatpush1.msra.mxu0 %v766
      %1027 = vmatprep.subr.mxu0 %v769
      %1028 = vmatpush1.msra.mxu0 %v768
      %1029 = vmatprep.subr.mxu0 %v771
      %1030 = vmatpush1.msra.mxu0 %v770
      %1031 = vmatprep.subr.mxu0 %v773
      %1032 = vmatpush1.msra.mxu0 %v772
      %1033 = vmatprep.subr.mxu0 %v775
      %1034 = vmatpush1.msra.mxu0 %v774
      %1035 = vmatprep.subr.mxu0 %v777
      %1036 = vmatpush1.msra.mxu0 %v776
      %1037 = vmatprep.mubr.f32.mxu0 %v707
      %1038 = vmatmul.mubr.f32.gmra.mrb[0].mxu0 %v706
      %v1039 = vpop.f32.mrb[0].mxu0
      %v1040 = vadd.f32 0.0, %v1039
      %v1041 = vpop.f32.mrb[0].mxu0
      %v1042 = vadd.f32 0.0, %v1041
      %1043 = vmatprep.mubr.f32.mxu0 %v709
      %1044 = vmatmul.mubr.f32.gmra.mrb[0].mxu0 %v708
      %v1045 = vpop.f32.mrb[0].mxu0
      %v1046 = vadd.f32 0.0, %v1045
      %v1047 = vpop.f32.mrb[0].mxu0
      %v1048 = vadd.f32 0.0, %v1047
      %1049 = vmatprep.mubr.f32.mxu0 %v711
      %1050 = vmatmul.mubr.f32.gmra.mrb[0].mxu0 %v710
      %v1051 = vpop.f32.mrb[0].mxu0
      %v1052 = vadd.f32 0.0, %v1051
      %v1053 = vpop.f32.mrb[0].mxu0
      %v1054 = vadd.f32 0.0, %v1053
      %1055 = vmatprep.mubr.f32.mxu0 %v713
      %1056 = vmatmul.mubr.f32.gmra.mrb[0].mxu0 %v712
      %v1057 = vpop.f32.mrb[0].mxu0
      %v1058 = vadd.f32 0.0, %v1057
      %v1059 = vpop.f32.mrb[0].mxu0
      %v1060 = vadd.f32 0.0, %v1059
      %1061 = vdwg.mxu0
      %1062 = vmatprep.subr.mxu0 %v780
      %1063 = vmatpush1.msra.mxu0 %v779
      %1064 = vmatprep.subr.mxu0 %v782
      %1065 = vmatpush1.msra.mxu0 %v781
      %1066 = vmatprep.subr.mxu0 %v784
      %1067 = vmatpush1.msra.mxu0 %v783
      %1068 = vmatprep.subr.mxu0 %v786
      %1069 = vmatpush1.msra.mxu0 %v785
      %1070 = vmatprep.subr.mxu0 %v788
      %1071 = vmatpush1.msra.mxu0 %v787
      %1072 = vmatprep.subr.mxu0 %v790
      %1073 = vmatpush1.msra.mxu0 %v789
      %1074 = vmatprep.subr.mxu0 %v792
      %1075 = vmatpush1.msra.mxu0 %v791
      %1076 = vmatprep.subr.mxu0 %v794
      %1077 = vmatpush1.msra.mxu0 %v793
      %1078 = vmatprep.subr.mxu0 %v796
      %1079 = vmatpush1.msra.mxu0 %v795
      %1080 = vmatprep.subr.mxu0 %v798
      %1081 = vmatpush1.msra.mxu0 %v797
      %1082 = vmatprep.subr.mxu0 %v800
      %1083 = vmatpush1.msra.mxu0 %v799
      %1084 = vmatprep.subr.mxu0 %v802
      %1085 = vmatpush1.msra.mxu0 %v801
      %1086 = vmatprep.subr.mxu0 %v804
      %1087 = vmatpush1.msra.mxu0 %v803
      %1088 = vmatprep.subr.mxu0 %v806
      %1089 = vmatpush1.msra.mxu0 %v805
      %1090 = vmatprep.subr.mxu0 %v808
      %1091 = vmatpush1.msra.mxu0 %v807
      %1092 = vmatprep.subr.mxu0 %v810
      %1093 = vmatpush1.msra.mxu0 %v809
      %1094 = vmatprep.subr.mxu0 %v812
      %1095 = vmatpush1.msra.mxu0 %v811
      %1096 = vmatprep.subr.mxu0 %v814
      %1097 = vmatpush1.msra.mxu0 %v813
      %1098 = vmatprep.subr.mxu0 %v816
      %1099 = vmatpush1.msra.mxu0 %v815
      %1100 = vmatprep.subr.mxu0 %v818
      %1101 = vmatpush1.msra.mxu0 %v817
      %1102 = vmatprep.subr.mxu0 %v820
      %1103 = vmatpush1.msra.mxu0 %v819
      %1104 = vmatprep.subr.mxu0 %v822
      %1105 = vmatpush1.msra.mxu0 %v821
      %1106 = vmatprep.subr.mxu0 %v824
      %1107 = vmatpush1.msra.mxu0 %v823
      %1108 = vmatprep.subr.mxu0 %v826
      %1109 = vmatpush1.msra.mxu0 %v825
      %1110 = vmatprep.subr.mxu0 %v828
      %1111 = vmatpush1.msra.mxu0 %v827
      %1112 = vmatprep.subr.mxu0 %v830
      %1113 = vmatpush1.msra.mxu0 %v829
      %1114 = vmatprep.subr.mxu0 %v832
      %1115 = vmatpush1.msra.mxu0 %v831
      %1116 = vmatprep.subr.mxu0 %v834
      %1117 = vmatpush1.msra.mxu0 %v833
      %1118 = vmatprep.subr.mxu0 %v836
      %1119 = vmatpush1.msra.mxu0 %v835
      %1120 = vmatprep.subr.mxu0 %v838
      %1121 = vmatpush1.msra.mxu0 %v837
      %1122 = vmatprep.subr.mxu0 %v840
      %1123 = vmatpush1.msra.mxu0 %v839
      %1124 = vmatprep.subr.mxu0 %v842
      %1125 = vmatpush1.msra.mxu0 %v841
      %1126 = vmatprep.mubr.f32.mxu0 %v707
      %1127 = vmatmul.mubr.f32.gmra.mrb[0].mxu0 %v706
      %v1128 = vpop.f32.mrb[0].mxu0
      %v1129 = vadd.f32 0.0, %v1128
      %v1130 = vpop.f32.mrb[0].mxu0
      %v1131 = vadd.f32 0.0, %v1130
      %1132 = vmatprep.mubr.f32.mxu0 %v709
      %1133 = vmatmul.mubr.f32.gmra.mrb[0].mxu0 %v708
      %v1134 = vpop.f32.mrb[0].mxu0
      %v1135 = vadd.f32 0.0, %v1134
      %v1136 = vpop.f32.mrb[0].mxu0
      %v1137 = vadd.f32 0.0, %v1136
      %1138 = vmatprep.mubr.f32.mxu0 %v711
      %1139 = vmatmul.mubr.f32.gmra.mrb[0].mxu0 %v710
      %v1140 = vpop.f32.mrb[0].mxu0
      %v1141 = vadd.f32 0.0, %v1140
      %v1142 = vpop.f32.mrb[0].mxu0
      %v1143 = vadd.f32 0.0, %v1142
      %1144 = vmatprep.mubr.f32.mxu0 %v713
      %1145 = vmatmul.mubr.f32.gmra.mrb[0].mxu0 %v712
      %v1146 = vpop.f32.mrb[0].mxu0
      %v1147 = vadd.f32 0.0, %v1146
      %v1148 = vpop.f32.mrb[0].mxu0
      %v1149 = vadd.f32 0.0, %v1148
      %1150 = vdwg.mxu0
      %v1151 = vld [vmem:[%s4] sm:$0xff]
      %v1152 = vld [vmem:[%s4 + $0x8] sm:$0xff]
      %v1153 = vld [vmem:[%s4 + $0x10] sm:$0xff]
      %v1154 = vld [vmem:[%s4 + $0x18] sm:$0xff]
      %vm1155 = vcmask 785408
      %v1157 = vsel %vm1155, %v1151, 0
      %v1160 = vsel %vm1155, %v1152, 0
      %v1163 = vsel %vm1155, %v1153, 0
      %v1166 = vsel %vm1155, %v1154, 0
      %1168 = vmatprep.subr.mxu0 %v1042
      %1169 = vmatpush1.msra.mxu0 %v1040
      %1170 = vmatprep.subr.mxu0 %v1048
      %1171 = vmatpush1.msra.mxu0 %v1046
      %1172 = vmatprep.subr.mxu0 %v1054
      %1173 = vmatpush1.msra.mxu0 %v1052
      %1174 = vmatprep.subr.mxu0 %v1060
      %1175 = vmatpush1.msra.mxu0 %v1058
      %1176 = vmatprep.subr.mxu0 %v707
      %1177 = vmatpush1.msra.mxu0 %v706
      %1178 = vmatprep.subr.mxu0 %v709
      %1179 = vmatpush1.msra.mxu0 %v708
      %1180 = vmatprep.subr.mxu0 %v711
      %1181 = vmatpush1.msra.mxu0 %v710
      %1182 = vmatprep.subr.mxu0 %v713
      %1183 = vmatpush1.msra.mxu0 %v712
      %1184 = vmatprep.subr.mxu0 %v1131
      %1185 = vmatpush1.msra.mxu0 %v1129
      %1186 = vmatprep.subr.mxu0 %v1137
      %1187 = vmatpush1.msra.mxu0 %v1135
      %1188 = vmatprep.subr.mxu0 %v1143
      %1189 = vmatpush1.msra.mxu0 %v1141
      %1190 = vmatprep.subr.mxu0 %v1149
      %1191 = vmatpush1.msra.mxu0 %v1147
      %1192 = vmatprep.subr.mxu0 0.0
      %1193 = vmatpush1.msra.mxu0 0.0
      %1194 = vmatprep.subr.mxu0 0.0
      %1195 = vmatpush1.msra.mxu0 0.0
      %1196 = vmatprep.subr.mxu0 0.0
      %1197 = vmatpush1.msra.mxu0 0.0
      %1198 = vmatprep.subr.mxu0 0.0
      %1199 = vmatpush1.msra.mxu0 0.0
      %1200 = vmatprep.subr.mxu0 0.0
      %1201 = vmatpush1.msra.mxu0 0.0
      %1202 = vmatprep.subr.mxu0 0.0
      %1203 = vmatpush1.msra.mxu0 0.0
      %1204 = vmatprep.subr.mxu0 0.0
      %1205 = vmatpush1.msra.mxu0 0.0
      %1206 = vmatprep.subr.mxu0 0.0
      %1207 = vmatpush1.msra.mxu0 0.0
      %1208 = vmatprep.subr.mxu0 0.0
      %1209 = vmatpush1.msra.mxu0 0.0
      %1210 = vmatprep.subr.mxu0 0.0
      %1211 = vmatpush1.msra.mxu0 0.0
      %1212 = vmatprep.subr.mxu0 0.0
      %1213 = vmatpush1.msra.mxu0 0.0
      %1214 = vmatprep.subr.mxu0 0.0
      %1215 = vmatpush1.msra.mxu0 0.0
      %1216 = vmatprep.subr.mxu0 0.0
      %1217 = vmatpush1.msra.mxu0 0.0
      %1218 = vmatprep.subr.mxu0 0.0
      %1219 = vmatpush1.msra.mxu0 0.0
      %1220 = vmatprep.subr.mxu0 0.0
      %1221 = vmatpush1.msra.mxu0 0.0
      %1222 = vmatprep.subr.mxu0 0.0
      %1223 = vmatpush1.msra.mxu0 0.0
      %1224 = vmatprep.subr.mxu0 0.0
      %1225 = vmatpush1.msra.mxu0 0.0
      %1226 = vmatprep.subr.mxu0 0.0
      %1227 = vmatpush1.msra.mxu0 0.0
      %1228 = vmatprep.subr.mxu0 0.0
      %1229 = vmatpush1.msra.mxu0 0.0
      %1230 = vmatprep.subr.mxu0 0.0
      %1231 = vmatpush1.msra.mxu0 0.0
      %1232 = vmatprep.mubr.f32.mxu0 0.0
      %1233 = vmatmul.mubr.f32.gmra.mrb[0].mxu0 %v1157
      %v1234 = vpop.f32.mrb[0].mxu0
      %v1235 = vadd.f32 0.0, %v1234
      %v1236 = vpop.f32.mrb[0].mxu0
      %v1237 = vadd.f32 0.0, %v1236
      %1238 = vmatprep.mubr.f32.mxu0 0.0
      %1239 = vmatmul.mubr.f32.gmra.mrb[0].mxu0 %v1160
      %v1240 = vpop.f32.mrb[0].mxu0
      %v1241 = vadd.f32 0.0, %v1240
      %v1242 = vpop.f32.mrb[0].mxu0
      %v1243 = vadd.f32 0.0, %v1242
      %1244 = vmatprep.mubr.f32.mxu0 0.0
      %1245 = vmatmul.mubr.f32.gmra.mrb[0].mxu0 %v1163
      %v1246 = vpop.f32.mrb[0].mxu0
      %v1247 = vadd.f32 0.0, %v1246
      %v1248 = vpop.f32.mrb[0].mxu0
      %v1249 = vadd.f32 0.0, %v1248
      %1250 = vmatprep.mubr.f32.mxu0 0.0
      %1251 = vmatmul.mubr.f32.gmra.mrb[0].mxu0 %v1166
      %v1252 = vpop.f32.mrb[0].mxu0
      %v1253 = vadd.f32 0.0, %v1252
      %v1254 = vpop.f32.mrb[0].mxu0
      %v1255 = vadd.f32 0.0, %v1254
      %1256 = vdwg.mxu0
      %s1257 = scalar_lea.vmem %s4, 32
      %v1258 = vld [vmem:[%s1257] sm:$0xff]
      %v1259 = vld [vmem:[%s1257 + $0x8] sm:$0xff]
      %v1260 = vld [vmem:[%s1257 + $0x10] sm:$0xff]
      %v1261 = vld [vmem:[%s1257 + $0x18] sm:$0xff]
      %s1262 = scalar_lea.vmem %s4, 64
      %v1263 = vld [vmem:[%s1262] sm:$0xff]
      %v1264 = vld [vmem:[%s1262 + $0x8] sm:$0xff]
      %v1265 = vld [vmem:[%s1262 + $0x10] sm:$0xff]
      %v1266 = vld [vmem:[%s1262 + $0x18] sm:$0xff]
      %v1268 = vsel %vm1155, %v1263, 0
      %v1271 = vsel %vm1155, %v1264, 0
      %v1274 = vsel %vm1155, %v1265, 0
      %v1277 = vsel %vm1155, %v1266, 0
      %1279 = vmatprep.subr.mxu0 %v1042
      %1280 = vmatpush1.msra.mxu0 %v1040
      %1281 = vmatprep.subr.mxu0 %v1048
      %1282 = vmatpush1.msra.mxu0 %v1046
      %1283 = vmatprep.subr.mxu0 %v1054
      %1284 = vmatpush1.msra.mxu0 %v1052
      %1285 = vmatprep.subr.mxu0 %v1060
      %1286 = vmatpush1.msra.mxu0 %v1058
      %1287 = vmatprep.subr.mxu0 %v707
      %1288 = vmatpush1.msra.mxu0 %v706
      %1289 = vmatprep.subr.mxu0 %v709
      %1290 = vmatpush1.msra.mxu0 %v708
      %1291 = vmatprep.subr.mxu0 %v711
      %1292 = vmatpush1.msra.mxu0 %v710
      %1293 = vmatprep.subr.mxu0 %v713
      %1294 = vmatpush1.msra.mxu0 %v712
      %1295 = vmatprep.subr.mxu0 %v1131
      %1296 = vmatpush1.msra.mxu0 %v1129
      %1297 = vmatprep.subr.mxu0 %v1137
      %1298 = vmatpush1.msra.mxu0 %v1135
      %1299 = vmatprep.subr.mxu0 %v1143
      %1300 = vmatpush1.msra.mxu0 %v1141
      %1301 = vmatprep.subr.mxu0 %v1149
      %1302 = vmatpush1.msra.mxu0 %v1147
      %1303 = vmatprep.subr.mxu0 0.0
      %1304 = vmatpush1.msra.mxu0 0.0
      %1305 = vmatprep.subr.mxu0 0.0
      %1306 = vmatpush1.msra.mxu0 0.0
      %1307 = vmatprep.subr.mxu0 0.0
      %1308 = vmatpush1.msra.mxu0 0.0
      %1309 = vmatprep.subr.mxu0 0.0
      %1310 = vmatpush1.msra.mxu0 0.0
      %1311 = vmatprep.subr.mxu0 0.0
      %1312 = vmatpush1.msra.mxu0 0.0
      %1313 = vmatprep.subr.mxu0 0.0
      %1314 = vmatpush1.msra.mxu0 0.0
      %1315 = vmatprep.subr.mxu0 0.0
      %1316 = vmatpush1.msra.mxu0 0.0
      %1317 = vmatprep.subr.mxu0 0.0
      %1318 = vmatpush1.msra.mxu0 0.0
      %1319 = vmatprep.subr.mxu0 0.0
      %1320 = vmatpush1.msra.mxu0 0.0
      %1321 = vmatprep.subr.mxu0 0.0
      %1322 = vmatpush1.msra.mxu0 0.0
      %1323 = vmatprep.subr.mxu0 0.0
      %1324 = vmatpush1.msra.mxu0 0.0
      %1325 = vmatprep.subr.mxu0 0.0
      %1326 = vmatpush1.msra.mxu0 0.0
      %1327 = vmatprep.subr.mxu0 0.0
      %1328 = vmatpush1.msra.mxu0 0.0
      %1329 = vmatprep.subr.mxu0 0.0
      %1330 = vmatpush1.msra.mxu0 0.0
      %1331 = vmatprep.subr.mxu0 0.0
      %1332 = vmatpush1.msra.mxu0 0.0
      %1333 = vmatprep.subr.mxu0 0.0
      %1334 = vmatpush1.msra.mxu0 0.0
      %1335 = vmatprep.subr.mxu0 0.0
      %1336 = vmatpush1.msra.mxu0 0.0
      %1337 = vmatprep.subr.mxu0 0.0
      %1338 = vmatpush1.msra.mxu0 0.0
      %1339 = vmatprep.subr.mxu0 0.0
      %1340 = vmatpush1.msra.mxu0 0.0
      %1341 = vmatprep.subr.mxu0 0.0
      %1342 = vmatpush1.msra.mxu0 0.0
      %1343 = vmatprep.mubr.f32.mxu0 0.0
      %1344 = vmatmul.mubr.f32.gmra.mrb[0].mxu0 %v1268
      %v1345 = vpop.f32.mrb[0].mxu0
      %v1346 = vadd.f32 0.0, %v1345
      %v1347 = vpop.f32.mrb[0].mxu0
      %v1348 = vadd.f32 0.0, %v1347
      %1349 = vmatprep.mubr.f32.mxu0 0.0
      %1350 = vmatmul.mubr.f32.gmra.mrb[0].mxu0 %v1271
      %v1351 = vpop.f32.mrb[0].mxu0
      %v1352 = vadd.f32 0.0, %v1351
      %v1353 = vpop.f32.mrb[0].mxu0
      %v1354 = vadd.f32 0.0, %v1353
      %1355 = vmatprep.mubr.f32.mxu0 0.0
      %1356 = vmatmul.mubr.f32.gmra.mrb[0].mxu0 %v1274
      %v1357 = vpop.f32.mrb[0].mxu0
      %v1358 = vadd.f32 0.0, %v1357
      %v1359 = vpop.f32.mrb[0].mxu0
      %v1360 = vadd.f32 0.0, %v1359
      %1361 = vmatprep.mubr.f32.mxu0 0.0
      %1362 = vmatmul.mubr.f32.gmra.mrb[0].mxu0 %v1277
      %v1363 = vpop.f32.mrb[0].mxu0
      %v1364 = vadd.f32 0.0, %v1363
      %v1365 = vpop.f32.mrb[0].mxu0
      %v1366 = vadd.f32 0.0, %v1365
      %1367 = vdwg.mxu0
      %1368 = vmatprep.subr.mxu0 %v845
      %1369 = vmatpush1.msra.mxu0 %v844
      %1370 = vmatprep.subr.mxu0 %v847
      %1371 = vmatpush1.msra.mxu0 %v846
      %1372 = vmatprep.subr.mxu0 %v849
      %1373 = vmatpush1.msra.mxu0 %v848
      %1374 = vmatprep.subr.mxu0 %v851
      %1375 = vmatpush1.msra.mxu0 %v850
      %1376 = vmatprep.subr.mxu0 %v853
      %1377 = vmatpush1.msra.mxu0 %v852
      %1378 = vmatprep.subr.mxu0 %v855
      %1379 = vmatpush1.msra.mxu0 %v854
      %1380 = vmatprep.subr.mxu0 %v857
      %1381 = vmatpush1.msra.mxu0 %v856
      %1382 = vmatprep.subr.mxu0 %v859
      %1383 = vmatpush1.msra.mxu0 %v858
      %1384 = vmatprep.subr.mxu0 %v861
      %1385 = vmatpush1.msra.mxu0 %v860
      %1386 = vmatprep.subr.mxu0 %v863
      %1387 = vmatpush1.msra.mxu0 %v862
      %1388 = vmatprep.subr.mxu0 %v865
      %1389 = vmatpush1.msra.mxu0 %v864
      %1390 = vmatprep.subr.mxu0 %v867
      %1391 = vmatpush1.msra.mxu0 %v866
      %1392 = vmatprep.subr.mxu0 %v869
      %1393 = vmatpush1.msra.mxu0 %v868
      %1394 = vmatprep.subr.mxu0 %v871
      %1395 = vmatpush1.msra.mxu0 %v870
      %1396 = vmatprep.subr.mxu0 %v873
      %1397 = vmatpush1.msra.mxu0 %v872
      %1398 = vmatprep.subr.mxu0 %v875
      %1399 = vmatpush1.msra.mxu0 %v874
      %1400 = vmatprep.subr.mxu0 %v877
      %1401 = vmatpush1.msra.mxu0 %v876
      %1402 = vmatprep.subr.mxu0 %v879
      %1403 = vmatpush1.msra.mxu0 %v878
      %1404 = vmatprep.subr.mxu0 %v881
      %1405 = vmatpush1.msra.mxu0 %v880
      %1406 = vmatprep.subr.mxu0 %v883
      %1407 = vmatpush1.msra.mxu0 %v882
      %1408 = vmatprep.subr.mxu0 %v885
      %1409 = vmatpush1.msra.mxu0 %v884
      %1410 = vmatprep.subr.mxu0 %v887
      %1411 = vmatpush1.msra.mxu0 %v886
      %1412 = vmatprep.subr.mxu0 %v889
      %1413 = vmatpush1.msra.mxu0 %v888
      %1414 = vmatprep.subr.mxu0 %v891
      %1415 = vmatpush1.msra.mxu0 %v890
      %1416 = vmatprep.subr.mxu0 %v893
      %1417 = vmatpush1.msra.mxu0 %v892
      %1418 = vmatprep.subr.mxu0 %v895
      %1419 = vmatpush1.msra.mxu0 %v894
      %1420 = vmatprep.subr.mxu0 %v897
      %1421 = vmatpush1.msra.mxu0 %v896
      %1422 = vmatprep.subr.mxu0 %v899
      %1423 = vmatpush1.msra.mxu0 %v898
      %1424 = vmatprep.subr.mxu0 %v901
      %1425 = vmatpush1.msra.mxu0 %v900
      %1426 = vmatprep.subr.mxu0 %v903
      %1427 = vmatpush1.msra.mxu0 %v902
      %1428 = vmatprep.subr.mxu0 %v905
      %1429 = vmatpush1.msra.mxu0 %v904
      %1430 = vmatprep.subr.mxu0 %v907
      %1431 = vmatpush1.msra.mxu0 %v906
      %1432 = vmatprep.mubr.f32.mxu0 %v1237
      %1433 = vmatmul.mubr.f32.gmra.mrb[0].mxu0 %v1235
      %v1434 = vpop.f32.mrb[0].mxu0
      %v1435 = vadd.f32 0.0, %v1434
      %v1436 = vpop.f32.mrb[0].mxu0
      %v1437 = vadd.f32 0.0, %v1436
      %1438 = vmatprep.mubr.f32.mxu0 %v1243
      %1439 = vmatmul.mubr.f32.gmra.mrb[0].mxu0 %v1241
      %v1440 = vpop.f32.mrb[0].mxu0
      %v1441 = vadd.f32 0.0, %v1440
      %v1442 = vpop.f32.mrb[0].mxu0
      %v1443 = vadd.f32 0.0, %v1442
      %1444 = vmatprep.mubr.f32.mxu0 %v1249
      %1445 = vmatmul.mubr.f32.gmra.mrb[0].mxu0 %v1247
      %v1446 = vpop.f32.mrb[0].mxu0
      %v1447 = vadd.f32 0.0, %v1446
      %v1448 = vpop.f32.mrb[0].mxu0
      %v1449 = vadd.f32 0.0, %v1448
      %1450 = vmatprep.mubr.f32.mxu0 %v1255
      %1451 = vmatmul.mubr.f32.gmra.mrb[0].mxu0 %v1253
      %v1452 = vpop.f32.mrb[0].mxu0
      %v1453 = vadd.f32 0.0, %v1452
      %v1454 = vpop.f32.mrb[0].mxu0
      %v1455 = vadd.f32 0.0, %v1454
      %1456 = vdwg.mxu0
      %v1458 = vsel %vm1155, %v1258, 0
      %v1461 = vsel %vm1155, %v1259, 0
      %v1464 = vsel %vm1155, %v1260, 0
      %v1467 = vsel %vm1155, %v1261, 0
      %1469 = vmatprep.subr.mxu0 %v1042
      %1470 = vmatpush1.msra.mxu0 %v1040
      %1471 = vmatprep.subr.mxu0 %v1048
      %1472 = vmatpush1.msra.mxu0 %v1046
      %1473 = vmatprep.subr.mxu0 %v1054
      %1474 = vmatpush1.msra.mxu0 %v1052
      %1475 = vmatprep.subr.mxu0 %v1060
      %1476 = vmatpush1.msra.mxu0 %v1058
      %1477 = vmatprep.subr.mxu0 %v707
      %1478 = vmatpush1.msra.mxu0 %v706
      %1479 = vmatprep.subr.mxu0 %v709
      %1480 = vmatpush1.msra.mxu0 %v708
      %1481 = vmatprep.subr.mxu0 %v711
      %1482 = vmatpush1.msra.mxu0 %v710
      %1483 = vmatprep.subr.mxu0 %v713
      %1484 = vmatpush1.msra.mxu0 %v712
      %1485 = vmatprep.subr.mxu0 %v1131
      %1486 = vmatpush1.msra.mxu0 %v1129
      %1487 = vmatprep.subr.mxu0 %v1137
      %1488 = vmatpush1.msra.mxu0 %v1135
      %1489 = vmatprep.subr.mxu0 %v1143
      %1490 = vmatpush1.msra.mxu0 %v1141
      %1491 = vmatprep.subr.mxu0 %v1149
      %1492 = vmatpush1.msra.mxu0 %v1147
      %1493 = vmatprep.subr.mxu0 0.0
      %1494 = vmatpush1.msra.mxu0 0.0
      %1495 = vmatprep.subr.mxu0 0.0
      %1496 = vmatpush1.msra.mxu0 0.0
      %1497 = vmatprep.subr.mxu0 0.0
      %1498 = vmatpush1.msra.mxu0 0.0
      %1499 = vmatprep.subr.mxu0 0.0
      %1500 = vmatpush1.msra.mxu0 0.0
      %1501 = vmatprep.subr.mxu0 0.0
      %1502 = vmatpush1.msra.mxu0 0.0
      %1503 = vmatprep.subr.mxu0 0.0
      %1504 = vmatpush1.msra.mxu0 0.0
      %1505 = vmatprep.subr.mxu0 0.0
      %1506 = vmatpush1.msra.mxu0 0.0
      %1507 = vmatprep.subr.mxu0 0.0
      %1508 = vmatpush1.msra.mxu0 0.0
      %1509 = vmatprep.subr.mxu0 0.0
      %1510 = vmatpush1.msra.mxu0 0.0
      %1511 = vmatprep.subr.mxu0 0.0
      %1512 = vmatpush1.msra.mxu0 0.0
      %1513 = vmatprep.subr.mxu0 0.0
      %1514 = vmatpush1.msra.mxu0 0.0
      %1515 = vmatprep.subr.mxu0 0.0
      %1516 = vmatpush1.msra.mxu0 0.0
      %1517 = vmatprep.subr.mxu0 0.0
      %1518 = vmatpush1.msra.mxu0 0.0
      %1519 = vmatprep.subr.mxu0 0.0
      %1520 = vmatpush1.msra.mxu0 0.0
      %1521 = vmatprep.subr.mxu0 0.0
      %1522 = vmatpush1.msra.mxu0 0.0
      %1523 = vmatprep.subr.mxu0 0.0
      %1524 = vmatpush1.msra.mxu0 0.0
      %1525 = vmatprep.subr.mxu0 0.0
      %1526 = vmatpush1.msra.mxu0 0.0
      %1527 = vmatprep.subr.mxu0 0.0
      %1528 = vmatpush1.msra.mxu0 0.0
      %1529 = vmatprep.subr.mxu0 0.0
      %1530 = vmatpush1.msra.mxu0 0.0
      %1531 = vmatprep.subr.mxu0 0.0
      %1532 = vmatpush1.msra.mxu0 0.0
      %1533 = vmatprep.mubr.f32.mxu0 0.0
      %1534 = vmatmul.mubr.f32.gmra.mrb[0].mxu0 %v1458
      %v1535 = vpop.f32.mrb[0].mxu0
      %v1536 = vadd.f32 %v1435, %v1535
      %v1537 = vpop.f32.mrb[0].mxu0
      %v1538 = vadd.f32 %v1437, %v1537
      %1539 = vmatprep.mubr.f32.mxu0 0.0
      %1540 = vmatmul.mubr.f32.gmra.mrb[0].mxu0 %v1461
      %v1541 = vpop.f32.mrb[0].mxu0
      %v1542 = vadd.f32 %v1441, %v1541
      %v1543 = vpop.f32.mrb[0].mxu0
      %v1544 = vadd.f32 %v1443, %v1543
      %1545 = vmatprep.mubr.f32.mxu0 0.0
      %1546 = vmatmul.mubr.f32.gmra.mrb[0].mxu0 %v1464
      %v1547 = vpop.f32.mrb[0].mxu0
      %v1548 = vadd.f32 %v1447, %v1547
      %v1549 = vpop.f32.mrb[0].mxu0
      %v1550 = vadd.f32 %v1449, %v1549
      %1551 = vmatprep.mubr.f32.mxu0 0.0
      %1552 = vmatmul.mubr.f32.gmra.mrb[0].mxu0 %v1467
      %v1553 = vpop.f32.mrb[0].mxu0
      %v1554 = vadd.f32 %v1453, %v1553
      %v1555 = vpop.f32.mrb[0].mxu0
      %v1556 = vadd.f32 %v1455, %v1555
      %1557 = vdwg.mxu0
      %1558 = vmatprep.subr.mxu0 %v910
      %1559 = vmatpush1.msra.mxu0 %v909
      %1560 = vmatprep.subr.mxu0 %v912
      %1561 = vmatpush1.msra.mxu0 %v911
      %1562 = vmatprep.subr.mxu0 %v914
      %1563 = vmatpush1.msra.mxu0 %v913
      %1564 = vmatprep.subr.mxu0 %v916
      %1565 = vmatpush1.msra.mxu0 %v915
      %1566 = vmatprep.subr.mxu0 %v918
      %1567 = vmatpush1.msra.mxu0 %v917
      %1568 = vmatprep.subr.mxu0 %v920
      %1569 = vmatpush1.msra.mxu0 %v919
      %1570 = vmatprep.subr.mxu0 %v922
      %1571 = vmatpush1.msra.mxu0 %v921
      %1572 = vmatprep.subr.mxu0 %v924
      %1573 = vmatpush1.msra.mxu0 %v923
      %1574 = vmatprep.subr.mxu0 %v926
      %1575 = vmatpush1.msra.mxu0 %v925
      %1576 = vmatprep.subr.mxu0 %v928
      %1577 = vmatpush1.msra.mxu0 %v927
      %1578 = vmatprep.subr.mxu0 %v930
      %1579 = vmatpush1.msra.mxu0 %v929
      %1580 = vmatprep.subr.mxu0 %v932
      %1581 = vmatpush1.msra.mxu0 %v931
      %1582 = vmatprep.subr.mxu0 %v934
      %1583 = vmatpush1.msra.mxu0 %v933
      %1584 = vmatprep.subr.mxu0 %v936
      %1585 = vmatpush1.msra.mxu0 %v935
      %1586 = vmatprep.subr.mxu0 %v938
      %1587 = vmatpush1.msra.mxu0 %v937
      %1588 = vmatprep.subr.mxu0 %v940
      %1589 = vmatpush1.msra.mxu0 %v939
      %1590 = vmatprep.subr.mxu0 %v942
      %1591 = vmatpush1.msra.mxu0 %v941
      %1592 = vmatprep.subr.mxu0 %v944
      %1593 = vmatpush1.msra.mxu0 %v943
      %1594 = vmatprep.subr.mxu0 %v946
      %1595 = vmatpush1.msra.mxu0 %v945
      %1596 = vmatprep.subr.mxu0 %v948
      %1597 = vmatpush1.msra.mxu0 %v947
      %1598 = vmatprep.subr.mxu0 %v950
      %1599 = vmatpush1.msra.mxu0 %v949
      %1600 = vmatprep.subr.mxu0 %v952
      %1601 = vmatpush1.msra.mxu0 %v951
      %1602 = vmatprep.subr.mxu0 %v954
      %1603 = vmatpush1.msra.mxu0 %v953
      %1604 = vmatprep.subr.mxu0 %v956
      %1605 = vmatpush1.msra.mxu0 %v955
      %1606 = vmatprep.subr.mxu0 %v958
      %1607 = vmatpush1.msra.mxu0 %v957
      %1608 = vmatprep.subr.mxu0 %v960
      %1609 = vmatpush1.msra.mxu0 %v959
      %1610 = vmatprep.subr.mxu0 %v962
      %1611 = vmatpush1.msra.mxu0 %v961
      %1612 = vmatprep.subr.mxu0 %v964
      %1613 = vmatpush1.msra.mxu0 %v963
      %1614 = vmatprep.subr.mxu0 %v966
      %1615 = vmatpush1.msra.mxu0 %v965
      %1616 = vmatprep.subr.mxu0 %v968
      %1617 = vmatpush1.msra.mxu0 %v967
      %1618 = vmatprep.subr.mxu0 %v970
      %1619 = vmatpush1.msra.mxu0 %v969
      %1620 = vmatprep.subr.mxu0 %v972
      %1621 = vmatpush1.msra.mxu0 %v971
      %1622 = vmatprep.mubr.f32.mxu0 %v1348
      %1623 = vmatmul.mubr.f32.gmra.mrb[0].mxu0 %v1346
      %v1624 = vpop.f32.mrb[0].mxu0
      %v1625 = vadd.f32 0.0, %v1624
      %v1626 = vpop.f32.mrb[0].mxu0
      %v1627 = vadd.f32 0.0, %v1626
      %1628 = vmatprep.mubr.f32.mxu0 %v1354
      %1629 = vmatmul.mubr.f32.gmra.mrb[0].mxu0 %v1352
      %v1630 = vpop.f32.mrb[0].mxu0
      %v1631 = vadd.f32 0.0, %v1630
      %v1632 = vpop.f32.mrb[0].mxu0
      %v1633 = vadd.f32 0.0, %v1632
      %1634 = vmatprep.mubr.f32.mxu0 %v1360
      %1635 = vmatmul.mubr.f32.gmra.mrb[0].mxu0 %v1358
      %v1636 = vpop.f32.mrb[0].mxu0
      %v1637 = vadd.f32 0.0, %v1636
      %v1638 = vpop.f32.mrb[0].mxu0
      %v1639 = vadd.f32 0.0, %v1638
      %1640 = vmatprep.mubr.f32.mxu0 %v1366
      %1641 = vmatmul.mubr.f32.gmra.mrb[0].mxu0 %v1364
      %v1642 = vpop.f32.mrb[0].mxu0
      %v1643 = vadd.f32 0.0, %v1642
      %v1644 = vpop.f32.mrb[0].mxu0
      %v1645 = vadd.f32 0.0, %v1644
      %1646 = vdwg.mxu0
      %v1647 = vadd.f32 %v1536, %v1625
      %v1648 = vadd.f32 %v1538, %v1627
      %v1649 = vadd.f32 %v1542, %v1631
      %v1650 = vadd.f32 %v1544, %v1633
      %v1651 = vadd.f32 %v1548, %v1637
      %v1652 = vadd.f32 %v1550, %v1639
      %v1653 = vadd.f32 %v1554, %v1643
      %v1654 = vadd.f32 %v1556, %v1645
      %v1655 = vld [vmem:[%s5] sm:$0xff]
      %v1656 = vld [vmem:[%s5 + $0x8] sm:$0xff]
      %v1657 = vld [vmem:[%s5 + $0x10] sm:$0xff]
      %v1658 = vld [vmem:[%s5 + $0x18] sm:$0xff]
      %1660 = vset.pattern.permute.xlu0 0
      %1661 = vperm.xlu0 %1660, %v1655
      %v1662 = vpop.permute.xlu0 %1661
      %1665 = vset.pattern.permute.xlu0 0
      %1666 = vperm.xlu0 %1665, %v1656
      %v1667 = vpop.permute.xlu0 %1666
      %1670 = vset.pattern.permute.xlu0 0
      %1671 = vperm.xlu0 %1670, %v1657
      %v1672 = vpop.permute.xlu0 %1671
      %1675 = vset.pattern.permute.xlu0 0
      %1676 = vperm.xlu0 %1675, %v1658
      %v1677 = vpop.permute.xlu0 %1676
      %v1679 = vadd.f32 %v1647, %v1662
      %v1680 = vadd.f32 %v1648, %v1662
      %v1681 = vadd.f32 %v1649, %v1667
      %v1682 = vadd.f32 %v1650, %v1667
      %v1683 = vadd.f32 %v1651, %v1672
      %v1684 = vadd.f32 %v1652, %v1672
      %v1685 = vadd.f32 %v1653, %v1677
      %v1686 = vadd.f32 %v1654, %v1677
      %v1687 = vadd.f32 %v1679, %v1680
      %1688 = vadd.xlane.f32.xlu0 %v1687
      %v1689 = vpop.xlane.xlu0 %1688
      %v1690 = vadd.f32 %v1681, %v1682
      %1691 = vadd.xlane.f32.xlu0 %v1690
      %v1692 = vpop.xlane.xlu0 %1691
      %v1693 = vadd.f32 %v1683, %v1684
      %1694 = vadd.xlane.f32.xlu0 %v1693
      %v1695 = vpop.xlane.xlu0 %1694
      %v1696 = vadd.f32 %v1685, %v1686
      %1697 = vadd.xlane.f32.xlu0 %v1696
      %v1698 = vpop.xlane.xlu0 %1697
      %v1699 = vrcp.pop 256.0
      %v1700 = vmul.f32 %v1689, %v1699
      %v1701 = vmul.f32 %v1692, %v1699
      %v1702 = vmul.f32 %v1695, %v1699
      %v1703 = vmul.f32 %v1698, %v1699
      %v1704 = vld [vmem:[%s6] sm:$0xff]
      %v1705 = vld [vmem:[%s6 + $0x8] sm:$0xff]
      %v1706 = vld [vmem:[%s6 + $0x10] sm:$0xff]
      %v1707 = vld [vmem:[%s6 + $0x18] sm:$0xff]
      %v1708 = vmul.f32 %v1704, %v1700
      %v1709 = vmul.f32 %v1705, %v1701
      %v1710 = vmul.f32 %v1706, %v1702
      %v1711 = vmul.f32 %v1707, %v1703
      %vm1712 = vcmask 15360
      %v1713 = vsel %vm1712, %v1708, 0.0
      %v1714 = vsel %vm1712, %v1709, 0.0
      %v1715 = vadd.f32 %v1713, %v1714
      %v1716 = vsel %vm1712, %v1710, 0.0
      %v1717 = vadd.f32 %v1715, %v1716
      %v1718 = vsel %vm1712, %v1711, 0.0
      %v1719 = vadd.f32 %v1717, %v1718
      %v1720 = vrot.slane %v1719, 4
      %v1721 = vadd.f32 %v1719, %v1720
      %v1722 = vrot.slane %v1721, 2
      %v1723 = vadd.f32 %v1721, %v1722
      %v1724 = vrot.slane %v1723, 1
      %v1725 = vadd.f32 %v1723, %v1724
      %v1726 = vld [vmem:[%s7] sm:$0x1]
      %v1727 = vadd.f32 %v1725, %v1726
      %v1728 = vmax.f32 %v1727, 0.0
      %v1729 = vld [vmem:[%s8] sm:$0xff]
      %v1730 = vld [vmem:[%s8 + $0x8] sm:$0xff]
      %v1731 = vld [vmem:[%s8 + $0x10] sm:$0xff]
      %v1732 = vld [vmem:[%s8 + $0x18] sm:$0xff]
      %v1733 = vlaneseq
      %v1734 = vshrl.u32 %v1733, 7
      %v1735 = vsub.s32 0, %v1734
      %v1736 = vrot.slane %v1728, %v1735
      %v1737 = vmul.f32 %v1729, %v1736
      %v1738 = vmul.f32 %v1730, %v1736
      %v1739 = vmul.f32 %v1731, %v1736
      %v1740 = vmul.f32 %v1732, %v1736
      %v1741 = vsel %vm1712, %v1737, 0.0
      %1742 = vadd.xlane.f32.xlu0 %v1741
      %v1743 = vpop.xlane.xlu0 %1742
      %v1744 = vsel %vm1712, %v1738, 0.0
      %1745 = vadd.xlane.f32.xlu0 %v1744
      %v1746 = vpop.xlane.xlu0 %1745
      %v1747 = vsel %vm1712, %v1739, 0.0
      %1748 = vadd.xlane.f32.xlu0 %v1747
      %v1749 = vpop.xlane.xlu0 %1748
      %v1750 = vsel %vm1712, %v1740, 0.0
      %1751 = vadd.xlane.f32.xlu0 %v1750
      %v1752 = vpop.xlane.xlu0 %1751
      %v1753 = vld [vmem:[%s9] sm:$0xff]
      %v1754 = vld [vmem:[%s9 + $0x8] sm:$0xff]
      %v1755 = vld [vmem:[%s9 + $0x10] sm:$0xff]
      %v1756 = vld [vmem:[%s9 + $0x18] sm:$0xff]
      %v1757 = vadd.f32 %v1743, %v1753
      %v1758 = vadd.f32 %v1746, %v1754
      %v1759 = vadd.f32 %v1749, %v1755
      %v1760 = vadd.f32 %v1752, %v1756
      %v1761 = vxor.u32 %v1757, 2147483648
      %v1762 = vxor.u32 %v1758, 2147483648
      %v1763 = vxor.u32 %v1759, 2147483648
      %v1764 = vxor.u32 %v1760, 2147483648
      %v1765 = vmul.f32 %v1761, 1.442695
      %v1766 = vpow.pop %v1765
      %v1767 = vmul.f32 %v1762, 1.442695
      %v1768 = vpow.pop %v1767
      %v1769 = vmul.f32 %v1763, 1.442695
      %v1770 = vpow.pop %v1769
      %v1771 = vmul.f32 %v1764, 1.442695
      %v1772 = vpow.pop %v1771
      %v1773 = vadd.f32 %v1766, 1.0
      %v1774 = vadd.f32 %v1768, 1.0
      %v1775 = vadd.f32 %v1770, 1.0
      %v1776 = vadd.f32 %v1772, 1.0
      %v1777 = vrcp.pop %v1773
      %v1778 = vmul.f32 1.0, %v1777
      %v1779 = vrcp.pop %v1774
      %v1780 = vmul.f32 1.0, %v1779
      %v1781 = vrcp.pop %v1775
      %v1782 = vmul.f32 1.0, %v1781
      %v1783 = vrcp.pop %v1776
      %v1784 = vmul.f32 1.0, %v1783
      %1786 = vset.pattern.permute.xlu0 0
      %1787 = vperm.xlu0 %1786, %v1778
      %v1788 = vpop.permute.xlu0 %1787
      %1791 = vset.pattern.permute.xlu0 0
      %1792 = vperm.xlu0 %1791, %v1780
      %v1793 = vpop.permute.xlu0 %1792
      %1796 = vset.pattern.permute.xlu0 0
      %1797 = vperm.xlu0 %1796, %v1782
      %v1798 = vpop.permute.xlu0 %1797
      %1801 = vset.pattern.permute.xlu0 0
      %1802 = vperm.xlu0 %1801, %v1784
      %v1803 = vpop.permute.xlu0 %1802
      %v1805 = vmul.f32 %v1679, %v1788
      %v1806 = vmul.f32 %v1680, %v1788
      %v1807 = vmul.f32 %v1681, %v1793
      %v1808 = vmul.f32 %v1682, %v1793
      %v1809 = vmul.f32 %v1683, %v1798
      %v1810 = vmul.f32 %v1684, %v1798
      %v1811 = vmul.f32 %v1685, %v1803
      %v1812 = vmul.f32 %v1686, %v1803
      %v1813 = vld [vmem:[%s401] sm:$0xff]
      %v1814 = vld [vmem:[%s401 + $0x8] sm:$0xff]
      %v1815 = vld [vmem:[%s401 + $0x10] sm:$0xff]
      %v1816 = vld [vmem:[%s401 + $0x18] sm:$0xff]
      %v1817 = vld [vmem:[%s401 + $0x20] sm:$0xff]
      %v1818 = vld [vmem:[%s401 + $0x28] sm:$0xff]
      %v1819 = vld [vmem:[%s401 + $0x30] sm:$0xff]
      %v1820 = vld [vmem:[%s401 + $0x38] sm:$0xff]
      %v1821 = vadd.f32 %v1805, %v1813
      %v1822 = vadd.f32 %v1806, %v1814
      %v1823 = vadd.f32 %v1807, %v1815
      %v1824 = vadd.f32 %v1808, %v1816
      %v1825 = vadd.f32 %v1809, %v1817
      %v1826 = vadd.f32 %v1810, %v1818
      %v1827 = vadd.f32 %v1811, %v1819
      %v1828 = vadd.f32 %v1812, %v1820
      %1829 = vst [vmem:[%s406] sm:$0xff] %v1821
      %1830 = vst [vmem:[%s406 + $0x8] sm:$0xff] %v1822
      %1831 = vst [vmem:[%s406 + $0x10] sm:$0xff] %v1823
      %1832 = vst [vmem:[%s406 + $0x18] sm:$0xff] %v1824
      %1833 = vst [vmem:[%s406 + $0x20] sm:$0xff] %v1825
      %1834 = vst [vmem:[%s406 + $0x28] sm:$0xff] %v1826
      %1835 = vst [vmem:[%s406 + $0x30] sm:$0xff] %v1827
      %1836 = vst [vmem:[%s406 + $0x38] sm:$0xff] %v1828
      %p1837 = scmp.lt.s32.totalorder %s22, 1
      %s1838 = scalar_select %p1837, %s22, 1
      %s1839 = smul.addr %s1838, 8
      %s1840 = smul.addr %s1839, 8
      %s1841 = scalar_lea.vmem %s11, %s1840
      // Predicated region
      $region65: #{rcab_forward.1} parent=63 // pred_check
        %p1842 = pneg %p281
      $region66: #{rcab_forward.1} parent=63 // pred_check_branch
        %1844 = sbr.rel (%p1842) target = $region68
      $region67: #{rcab_forward.1} parent=63 // pred_region
        _
      $region68: #{rcab_forward.1} parent=63 // pred_fallthru
        _
    $region64: #{rcab_forward.1} parent=5 // pred_fallthru
      _
    %p1845 = scmp.le.s32.totalorder 2, %s17
    // Predicated region
    $region69: #{rcab_forward.1} parent=5 // pred_check
      %p1846 = pneg %p1845
    $region70: #{rcab_forward.1} parent=5 // pred_check_branch
      %1848 = sbr.rel (%p1846) target = $region72
    $region71: #{rcab_forward.1} parent=5 // pred_region
      %s1849 = ssub.s32 %s17, 2
      // Predicated region
      $region73: #{rcab_forward.1} parent=71 // pred_check
        %p1850 = pneg %p287
      $region74: #{rcab_forward.1} parent=71 // pred_check_branch
        %1852 = sbr.rel (%p1850) target = $region76
      $region75: #{rcab_forward.1} parent=71 // pred_region
        %p1853 = scmp.lt.s32.totalorder %s23, 1
        %s1854 = scalar_select %p1853, %s23, 1
        %s1855 = smul.addr %s1854, 8
        %s1856 = smul.addr %s1855, 8
        %s1857 = scalar_lea.vmem %s11, %s1856
      $region76: #{rcab_forward.1} parent=71 // pred_fallthru
        _
    $region72: #{rcab_forward.1} parent=5 // pred_fallthru
      _
  $region6: #{rcab_forward.1} parent=0 // loop_footer
    %s21 = sadd.s32 1, %s17
  $region7: #{rcab_forward.1} parent=0 // loop_footer_branch
    %16 = sbr.rel target = $region3
  $region8: #{rcab_forward.1} parent=0 // loop_exit
    _

</llo_original>
